<compile_context>
chip_gen: v7x
topology: tpu7x:2x2x1
jax: 0.10.0
libtpu: 0.0.40
codegen_flags: <defaults>
</compile_context>

<pallas_src>
import functools

import jax
import jax.numpy as jnp
from jax.experimental import pallas as pl
from jax.experimental.pallas import tpu as pltpu

# ---- B-spline configuration (efficient-KAN defaults) -------------------------
GRID_SIZE = 5
SPLINE_ORDER = 3
NUM_BASIS = GRID_SIZE + SPLINE_ORDER              # 8 basis functions / input feature
NUM_KNOTS = GRID_SIZE + 2 * SPLINE_ORDER + 1      # 12 knots / input feature
GRID_RANGE = (-1.0, 1.0)
_H = (GRID_RANGE[1] - GRID_RANGE[0]) / GRID_SIZE
# Uniform knot vector and Cox-de-Boor reciprocal denominators as compile-time
# Python constants (VPU scalar multiplies instead of vector divides + grid DMA).
KNOTS = tuple(GRID_RANGE[0] + (i - SPLINE_ORDER) * _H for i in range(NUM_KNOTS))
INV_DEN = tuple(1.0 / (k * _H) for k in range(1, SPLINE_ORDER + 1))

# ---- TPU layout constants -----------------------------------------------------
F_PAD = 128                                # every feature axis padded to a full lane width
K_FUSED = (NUM_BASIS + 1) * F_PAD          # fused contraction dim: [silu | 8 bases] * 128


def _round_up(a, b):
    return (a + b - 1) // b * b


def _kan_layer_math(x, w):
    """One KAN layer on padded activations.

    x: (TB, F_PAD) f32, padded lanes are zero.
    w: (K_FUSED, F_PAD) f32 fused [base; spline] weight, zero rows/cols for padding.
    """
    silu_x = x * jax.nn.sigmoid(x)

    # Order-0 B-spline indicators, unrolled as a list of 2-D (TB, F_PAD) vreg tiles.
    bases = [((x >= KNOTS[j]) & (x < KNOTS[j + 1])).astype(jnp.float32)
             for j in range(NUM_KNOTS - 1)]

    # Cox-de-Boor recursion on uniform knots; both denominators equal k*h, so a
    # single baked-in reciprocal per order.  Pure per-vreg VPU work, no relayouts.
    for k in range(1, SPLINE_ORDER + 1):
        inv = INV_DEN[k - 1]
        bases = [
            ((x - KNOTS[j]) * bases[j] + (KNOTS[j + k + 1] - x) * bases[j + 1]) * inv
            for j in range(NUM_KNOTS - 1 - k)
        ]
    # len(bases) == NUM_BASIS

    # Base + spline branches as ONE MXU matmul with K = 9 * 128 = 1152.
    feat = jnp.concatenate([silu_x] + bases, axis=-1)            # (TB, K_FUSED)
    return jnp.dot(feat, w, preferred_element_type=jnp.float32)  # (TB, F_PAD)


def kan2_kernel(x_ref, w0_ref, w1_ref, o_ref):
    """Fused 2-layer KAN forward (layer0 then layer1) in a single kernel."""
    x = x_ref[...]                                  # (TB, F_PAD) f32, already f32
    h = _kan_layer_math(x, w0_ref[...])             # hidden stays in VMEM/vregs
    o_ref[...] = _kan_layer_math(h, w1_ref[...])    # lane-dense (TB, 128) store


def fuse_layer_weights(base_w, spline_w):
    """Host-side fusion: (in,out) base + (NUM_BASIS,in,out) spline -> (K_FUSED, F_PAD).

    Row block 0 pairs with silu(x); row block 1+p pairs with basis p.  Padded
    input lanes / output lanes get zero weights so the lane padding is exact.
    """
    in_f, out_f = base_w.shape
    w = jnp.zeros((NUM_BASIS + 1, F_PAD, F_PAD), jnp.float32)
    w = w.at[0, :in_f, :out_f].set(base_w.astype(jnp.float32))
    w = w.at[1:, :in_f, :out_f].set(spline_w.astype(jnp.float32))
    return w.reshape(K_FUSED, F_PAD)


@functools.partial(jax.jit, static_argnames=("out_features", "max_tile_batch"))
def kan_forward(x, w0, w1, *, out_features, max_tile_batch=512):
    batch, in_f = x.shape
    tb = min(max_tile_batch, _round_up(batch, 8))   # sublane-aligned batch tile
    bp = _round_up(batch, tb)

    x_pad = jnp.zeros((bp, F_PAD), jnp.float32).at[:batch, :in_f].set(
        x.astype(jnp.float32))

    out = pl.pallas_call(
        kan2_kernel,
        out_shape=jax.ShapeDtypeStruct((bp, F_PAD), jnp.float32),
        grid_spec=pltpu.PrefetchScalarGridSpec(
            num_scalar_prefetch=0,
            grid=(bp // tb,),
            in_specs=[
                pl.BlockSpec((tb, F_PAD), lambda i: (i, 0)),       # activations: batch-tiled
                pl.BlockSpec((K_FUSED, F_PAD), lambda i: (0, 0)),  # layer-0 fused weight (resident)
                pl.BlockSpec((K_FUSED, F_PAD), lambda i: (0, 0)),  # layer-1 fused weight (resident)
            ],
            out_specs=pl.BlockSpec((tb, F_PAD), lambda i: (i, 0)),
        ),
        compiler_params=pltpu.CompilerParams(
            dimension_semantics=("parallel",),   # shard batch tiles across TCs on v7x
        ),
    )(x_pad, w0, w1)

    return out[:batch, :out_features]


# ---- pure-JAX reference (mirrors efficient-KAN layer math) --------------------
def kan_layer_ref(x, base_w, spline_w):
    g = jnp.asarray(KNOTS, jnp.float32)
    xe = x[..., None]                                            # (B, in, 1)
    bases = ((xe >= g[:-1]) & (xe < g[1:])).astype(jnp.float32)  # (B, in, 11)
    for k in range(1, SPLINE_ORDER + 1):
        left = (xe - g[: -(k + 1)]) / (g[k:-1] - g[: -(k + 1)]) * bases[..., :-1]
        right = (g[k + 1:] - xe) / (g[k + 1:] - g[1:-k]) * bases[..., 1:]
        bases = left + right                                     # (B, in, 11-k)
    base_out = jax.nn.silu(x) @ base_w
    spline_out = jnp.einsum("bik,kio->bo", bases, spline_w)
    return base_out + spline_out


if __name__ == "__main__":
    key = jax.random.PRNGKey(0)
    kx, k0a, k0b, k1a, k1b = jax.random.split(key, 5)

    batch, in_f, hidden_f, out_f = 8, 16, 32, 8
    x = jax.random.uniform(kx, (batch, in_f), jnp.float32, minval=-1.0, maxval=1.0)

    base_w0 = jax.random.normal(k0a, (in_f, hidden_f), jnp.float32) / jnp.sqrt(float(in_f))
    spline_w0 = jax.random.normal(k0b, (NUM_BASIS, in_f, hidden_f), jnp.float32) * 0.1
    base_w1 = jax.random.normal(k1a, (hidden_f, out_f), jnp.float32) / jnp.sqrt(float(hidden_f))
    spline_w1 = jax.random.normal(k1b, (NUM_BASIS, hidden_f, out_f), jnp.float32) * 0.1

    w0 = fuse_layer_weights(base_w0, spline_w0)
    w1 = fuse_layer_weights(base_w1, spline_w1)

    y = kan_forward(x, w0, w1, out_features=out_f)
    y = jax.block_until_ready(y)

    y_ref = kan_layer_ref(kan_layer_ref(x, base_w0, spline_w0), base_w1, spline_w1)

    assert y.shape == (batch, out_f)
    assert bool(jnp.all(jnp.isfinite(y)))
    assert bool(jnp.allclose(y, y_ref, atol=5e-3, rtol=5e-3)), float(
        jnp.max(jnp.abs(y - y_ref)))
    print("KERNEL_OK")
</pallas_src>

<mosaic_0001>
module attributes {stable_mosaic.version = 11 : i64} {
  func.func @kan2_kernel(%arg0: i32, %arg1: memref<8x128xf32, #tpu.memory_space<vmem>>, %arg2: memref<1152x128xf32, #tpu.memory_space<vmem>>, %arg3: memref<1152x128xf32, #tpu.memory_space<vmem>>, %arg4: memref<8x128xf32, #tpu.memory_space<vmem>>) attributes {dimension_semantics = [#tpu.dimension_semantics<parallel>], iteration_bounds = array<i64: 1>, scalar_prefetch = 0 : i64, scratch_operands = 0 : i64, tpu.core_type = #tpu.core_type<tc>, window_params = [{transform_indices = @transform_0, window_bounds = array<i64: 8, 128>}, {pipeline_mode = #tpu.pipeline_mode<synchronous>, transform_indices = @transform_1, window_bounds = array<i64: 1152, 128>}, {pipeline_mode = #tpu.pipeline_mode<synchronous>, transform_indices = @transform_2, window_bounds = array<i64: 1152, 128>}, {transform_indices = @transform_3, window_bounds = array<i64: 8, 128>}]} {
    %c0 = arith.constant 0 : index
    %c0_0 = arith.constant 0 : index
    %0 = vector.load %arg1[%c0, %c0_0] : memref<8x128xf32, #tpu.memory_space<vmem>>, vector<8x128xf32>
    %c0_1 = arith.constant 0 : index
    %c0_2 = arith.constant 0 : index
    %1 = vector.load %arg2[%c0_1, %c0_2] : memref<1152x128xf32, #tpu.memory_space<vmem>>, vector<1152x128xf32>
    %2 = arith.negf %0 : vector<8x128xf32>
    %3 = math.exp %2 : vector<8x128xf32>
    %cst = arith.constant 1.000000e+00 : f32
    %4 = vector.broadcast %cst : f32 to vector<8x128xf32>
    %5 = arith.addf %4, %3 : vector<8x128xf32>
    %6 = arith.divf %4, %5 : vector<8x128xf32>
    %7 = arith.mulf %0, %6 : vector<8x128xf32>
    %cst_3 = arith.constant -2.200000e+00 : f32
    %8 = vector.broadcast %cst_3 : f32 to vector<8x128xf32>
    %9 = arith.cmpf oge, %0, %8 : vector<8x128xf32>
    %cst_4 = arith.constant -1.800000e+00 : f32
    %10 = vector.broadcast %cst_4 : f32 to vector<8x128xf32>
    %11 = arith.cmpf olt, %0, %10 : vector<8x128xf32>
    %12 = arith.andi %9, %11 : vector<8x128xi1>
    %13 = arith.extui %12 : vector<8x128xi1> to vector<8x128xi32>
    %14 = arith.sitofp %13 : vector<8x128xi32> to vector<8x128xf32>
    %cst_5 = arith.constant -1.800000e+00 : f32
    %15 = vector.broadcast %cst_5 : f32 to vector<8x128xf32>
    %16 = arith.cmpf oge, %0, %15 : vector<8x128xf32>
    %cst_6 = arith.constant -1.400000e+00 : f32
    %17 = vector.broadcast %cst_6 : f32 to vector<8x128xf32>
    %18 = arith.cmpf olt, %0, %17 : vector<8x128xf32>
    %19 = arith.andi %16, %18 : vector<8x128xi1>
    %20 = arith.extui %19 : vector<8x128xi1> to vector<8x128xi32>
    %21 = arith.sitofp %20 : vector<8x128xi32> to vector<8x128xf32>
    %cst_7 = arith.constant -1.400000e+00 : f32
    %22 = vector.broadcast %cst_7 : f32 to vector<8x128xf32>
    %23 = arith.cmpf oge, %0, %22 : vector<8x128xf32>
    %cst_8 = arith.constant -1.000000e+00 : f32
    %24 = vector.broadcast %cst_8 : f32 to vector<8x128xf32>
    %25 = arith.cmpf olt, %0, %24 : vector<8x128xf32>
    %26 = arith.andi %23, %25 : vector<8x128xi1>
    %27 = arith.extui %26 : vector<8x128xi1> to vector<8x128xi32>
    %28 = arith.sitofp %27 : vector<8x128xi32> to vector<8x128xf32>
    %cst_9 = arith.constant -1.000000e+00 : f32
    %29 = vector.broadcast %cst_9 : f32 to vector<8x128xf32>
    %30 = arith.cmpf oge, %0, %29 : vector<8x128xf32>
    %cst_10 = arith.constant -6.000000e-01 : f32
    %31 = vector.broadcast %cst_10 : f32 to vector<8x128xf32>
    %32 = arith.cmpf olt, %0, %31 : vector<8x128xf32>
    %33 = arith.andi %30, %32 : vector<8x128xi1>
    %34 = arith.extui %33 : vector<8x128xi1> to vector<8x128xi32>
    %35 = arith.sitofp %34 : vector<8x128xi32> to vector<8x128xf32>
    %cst_11 = arith.constant -6.000000e-01 : f32
    %36 = vector.broadcast %cst_11 : f32 to vector<8x128xf32>
    %37 = arith.cmpf oge, %0, %36 : vector<8x128xf32>
    %cst_12 = arith.constant -2.000000e-01 : f32
    %38 = vector.broadcast %cst_12 : f32 to vector<8x128xf32>
    %39 = arith.cmpf olt, %0, %38 : vector<8x128xf32>
    %40 = arith.andi %37, %39 : vector<8x128xi1>
    %41 = arith.extui %40 : vector<8x128xi1> to vector<8x128xi32>
    %42 = arith.sitofp %41 : vector<8x128xi32> to vector<8x128xf32>
    %cst_13 = arith.constant -2.000000e-01 : f32
    %43 = vector.broadcast %cst_13 : f32 to vector<8x128xf32>
    %44 = arith.cmpf oge, %0, %43 : vector<8x128xf32>
    %cst_14 = arith.constant 2.000000e-01 : f32
    %45 = vector.broadcast %cst_14 : f32 to vector<8x128xf32>
    %46 = arith.cmpf olt, %0, %45 : vector<8x128xf32>
    %47 = arith.andi %44, %46 : vector<8x128xi1>
    %48 = arith.extui %47 : vector<8x128xi1> to vector<8x128xi32>
    %49 = arith.sitofp %48 : vector<8x128xi32> to vector<8x128xf32>
    %cst_15 = arith.constant 2.000000e-01 : f32
    %50 = vector.broadcast %cst_15 : f32 to vector<8x128xf32>
    %51 = arith.cmpf oge, %0, %50 : vector<8x128xf32>
    %cst_16 = arith.constant 6.000000e-01 : f32
    %52 = vector.broadcast %cst_16 : f32 to vector<8x128xf32>
    %53 = arith.cmpf olt, %0, %52 : vector<8x128xf32>
    %54 = arith.andi %51, %53 : vector<8x128xi1>
    %55 = arith.extui %54 : vector<8x128xi1> to vector<8x128xi32>
    %56 = arith.sitofp %55 : vector<8x128xi32> to vector<8x128xf32>
    %cst_17 = arith.constant 6.000000e-01 : f32
    %57 = vector.broadcast %cst_17 : f32 to vector<8x128xf32>
    %58 = arith.cmpf oge, %0, %57 : vector<8x128xf32>
    %cst_18 = arith.constant 1.000000e+00 : f32
    %59 = vector.broadcast %cst_18 : f32 to vector<8x128xf32>
    %60 = arith.cmpf olt, %0, %59 : vector<8x128xf32>
    %61 = arith.andi %58, %60 : vector<8x128xi1>
    %62 = arith.extui %61 : vector<8x128xi1> to vector<8x128xi32>
    %63 = arith.sitofp %62 : vector<8x128xi32> to vector<8x128xf32>
    %cst_19 = arith.constant 1.000000e+00 : f32
    %64 = vector.broadcast %cst_19 : f32 to vector<8x128xf32>
    %65 = arith.cmpf oge, %0, %64 : vector<8x128xf32>
    %cst_20 = arith.constant 1.400000e+00 : f32
    %66 = vector.broadcast %cst_20 : f32 to vector<8x128xf32>
    %67 = arith.cmpf olt, %0, %66 : vector<8x128xf32>
    %68 = arith.andi %65, %67 : vector<8x128xi1>
    %69 = arith.extui %68 : vector<8x128xi1> to vector<8x128xi32>
    %70 = arith.sitofp %69 : vector<8x128xi32> to vector<8x128xf32>
    %cst_21 = arith.constant 1.400000e+00 : f32
    %71 = vector.broadcast %cst_21 : f32 to vector<8x128xf32>
    %72 = arith.cmpf oge, %0, %71 : vector<8x128xf32>
    %cst_22 = arith.constant 1.800000e+00 : f32
    %73 = vector.broadcast %cst_22 : f32 to vector<8x128xf32>
    %74 = arith.cmpf olt, %0, %73 : vector<8x128xf32>
    %75 = arith.andi %72, %74 : vector<8x128xi1>
    %76 = arith.extui %75 : vector<8x128xi1> to vector<8x128xi32>
    %77 = arith.sitofp %76 : vector<8x128xi32> to vector<8x128xf32>
    %cst_23 = arith.constant 1.800000e+00 : f32
    %78 = vector.broadcast %cst_23 : f32 to vector<8x128xf32>
    %79 = arith.cmpf oge, %0, %78 : vector<8x128xf32>
    %cst_24 = arith.constant 2.200000e+00 : f32
    %80 = vector.broadcast %cst_24 : f32 to vector<8x128xf32>
    %81 = arith.cmpf olt, %0, %80 : vector<8x128xf32>
    %82 = arith.andi %79, %81 : vector<8x128xi1>
    %83 = arith.extui %82 : vector<8x128xi1> to vector<8x128xi32>
    %84 = arith.sitofp %83 : vector<8x128xi32> to vector<8x128xf32>
    %cst_25 = arith.constant -2.200000e+00 : f32
    %85 = vector.broadcast %cst_25 : f32 to vector<8x128xf32>
    %86 = arith.subf %0, %85 : vector<8x128xf32>
    %87 = arith.mulf %86, %14 : vector<8x128xf32>
    %cst_26 = arith.constant -1.400000e+00 : f32
    %88 = vector.broadcast %cst_26 : f32 to vector<8x128xf32>
    %89 = arith.subf %88, %0 : vector<8x128xf32>
    %90 = arith.mulf %89, %21 : vector<8x128xf32>
    %91 = arith.addf %87, %90 : vector<8x128xf32>
    %cst_27 = arith.constant 2.500000e+00 : f32
    %92 = vector.broadcast %cst_27 : f32 to vector<8x128xf32>
    %93 = arith.mulf %91, %92 : vector<8x128xf32>
    %cst_28 = arith.constant -1.800000e+00 : f32
    %94 = vector.broadcast %cst_28 : f32 to vector<8x128xf32>
    %95 = arith.subf %0, %94 : vector<8x128xf32>
    %96 = arith.mulf %95, %21 : vector<8x128xf32>
    %cst_29 = arith.constant -1.000000e+00 : f32
    %97 = vector.broadcast %cst_29 : f32 to vector<8x128xf32>
    %98 = arith.subf %97, %0 : vector<8x128xf32>
    %99 = arith.mulf %98, %28 : vector<8x128xf32>
    %100 = arith.addf %96, %99 : vector<8x128xf32>
    %cst_30 = arith.constant 2.500000e+00 : f32
    %101 = vector.broadcast %cst_30 : f32 to vector<8x128xf32>
    %102 = arith.mulf %100, %101 : vector<8x128xf32>
    %cst_31 = arith.constant -1.400000e+00 : f32
    %103 = vector.broadcast %cst_31 : f32 to vector<8x128xf32>
    %104 = arith.subf %0, %103 : vector<8x128xf32>
    %105 = arith.mulf %104, %28 : vector<8x128xf32>
    %cst_32 = arith.constant -6.000000e-01 : f32
    %106 = vector.broadcast %cst_32 : f32 to vector<8x128xf32>
    %107 = arith.subf %106, %0 : vector<8x128xf32>
    %108 = arith.mulf %107, %35 : vector<8x128xf32>
    %109 = arith.addf %105, %108 : vector<8x128xf32>
    %cst_33 = arith.constant 2.500000e+00 : f32
    %110 = vector.broadcast %cst_33 : f32 to vector<8x128xf32>
    %111 = arith.mulf %109, %110 : vector<8x128xf32>
    %cst_34 = arith.constant -1.000000e+00 : f32
    %112 = vector.broadcast %cst_34 : f32 to vector<8x128xf32>
    %113 = arith.subf %0, %112 : vector<8x128xf32>
    %114 = arith.mulf %113, %35 : vector<8x128xf32>
    %cst_35 = arith.constant -2.000000e-01 : f32
    %115 = vector.broadcast %cst_35 : f32 to vector<8x128xf32>
    %116 = arith.subf %115, %0 : vector<8x128xf32>
    %117 = arith.mulf %116, %42 : vector<8x128xf32>
    %118 = arith.addf %114, %117 : vector<8x128xf32>
    %cst_36 = arith.constant 2.500000e+00 : f32
    %119 = vector.broadcast %cst_36 : f32 to vector<8x128xf32>
    %120 = arith.mulf %118, %119 : vector<8x128xf32>
    %cst_37 = arith.constant -6.000000e-01 : f32
    %121 = vector.broadcast %cst_37 : f32 to vector<8x128xf32>
    %122 = arith.subf %0, %121 : vector<8x128xf32>
    %123 = arith.mulf %122, %42 : vector<8x128xf32>
    %cst_38 = arith.constant 2.000000e-01 : f32
    %124 = vector.broadcast %cst_38 : f32 to vector<8x128xf32>
    %125 = arith.subf %124, %0 : vector<8x128xf32>
    %126 = arith.mulf %125, %49 : vector<8x128xf32>
    %127 = arith.addf %123, %126 : vector<8x128xf32>
    %cst_39 = arith.constant 2.500000e+00 : f32
    %128 = vector.broadcast %cst_39 : f32 to vector<8x128xf32>
    %129 = arith.mulf %127, %128 : vector<8x128xf32>
    %cst_40 = arith.constant -2.000000e-01 : f32
    %130 = vector.broadcast %cst_40 : f32 to vector<8x128xf32>
    %131 = arith.subf %0, %130 : vector<8x128xf32>
    %132 = arith.mulf %131, %49 : vector<8x128xf32>
    %cst_41 = arith.constant 6.000000e-01 : f32
    %133 = vector.broadcast %cst_41 : f32 to vector<8x128xf32>
    %134 = arith.subf %133, %0 : vector<8x128xf32>
    %135 = arith.mulf %134, %56 : vector<8x128xf32>
    %136 = arith.addf %132, %135 : vector<8x128xf32>
    %cst_42 = arith.constant 2.500000e+00 : f32
    %137 = vector.broadcast %cst_42 : f32 to vector<8x128xf32>
    %138 = arith.mulf %136, %137 : vector<8x128xf32>
    %cst_43 = arith.constant 2.000000e-01 : f32
    %139 = vector.broadcast %cst_43 : f32 to vector<8x128xf32>
    %140 = arith.subf %0, %139 : vector<8x128xf32>
    %141 = arith.mulf %140, %56 : vector<8x128xf32>
    %cst_44 = arith.constant 1.000000e+00 : f32
    %142 = vector.broadcast %cst_44 : f32 to vector<8x128xf32>
    %143 = arith.subf %142, %0 : vector<8x128xf32>
    %144 = arith.mulf %143, %63 : vector<8x128xf32>
    %145 = arith.addf %141, %144 : vector<8x128xf32>
    %cst_45 = arith.constant 2.500000e+00 : f32
    %146 = vector.broadcast %cst_45 : f32 to vector<8x128xf32>
    %147 = arith.mulf %145, %146 : vector<8x128xf32>
    %cst_46 = arith.constant 6.000000e-01 : f32
    %148 = vector.broadcast %cst_46 : f32 to vector<8x128xf32>
    %149 = arith.subf %0, %148 : vector<8x128xf32>
    %150 = arith.mulf %149, %63 : vector<8x128xf32>
    %cst_47 = arith.constant 1.400000e+00 : f32
    %151 = vector.broadcast %cst_47 : f32 to vector<8x128xf32>
    %152 = arith.subf %151, %0 : vector<8x128xf32>
    %153 = arith.mulf %152, %70 : vector<8x128xf32>
    %154 = arith.addf %150, %153 : vector<8x128xf32>
    %cst_48 = arith.constant 2.500000e+00 : f32
    %155 = vector.broadcast %cst_48 : f32 to vector<8x128xf32>
    %156 = arith.mulf %154, %155 : vector<8x128xf32>
    %cst_49 = arith.constant 1.000000e+00 : f32
    %157 = vector.broadcast %cst_49 : f32 to vector<8x128xf32>
    %158 = arith.subf %0, %157 : vector<8x128xf32>
    %159 = arith.mulf %158, %70 : vector<8x128xf32>
    %cst_50 = arith.constant 1.800000e+00 : f32
    %160 = vector.broadcast %cst_50 : f32 to vector<8x128xf32>
    %161 = arith.subf %160, %0 : vector<8x128xf32>
    %162 = arith.mulf %161, %77 : vector<8x128xf32>
    %163 = arith.addf %159, %162 : vector<8x128xf32>
    %cst_51 = arith.constant 2.500000e+00 : f32
    %164 = vector.broadcast %cst_51 : f32 to vector<8x128xf32>
    %165 = arith.mulf %163, %164 : vector<8x128xf32>
    %cst_52 = arith.constant 1.400000e+00 : f32
    %166 = vector.broadcast %cst_52 : f32 to vector<8x128xf32>
    %167 = arith.subf %0, %166 : vector<8x128xf32>
    %168 = arith.mulf %167, %77 : vector<8x128xf32>
    %cst_53 = arith.constant 2.200000e+00 : f32
    %169 = vector.broadcast %cst_53 : f32 to vector<8x128xf32>
    %170 = arith.subf %169, %0 : vector<8x128xf32>
    %171 = arith.mulf %170, %84 : vector<8x128xf32>
    %172 = arith.addf %168, %171 : vector<8x128xf32>
    %cst_54 = arith.constant 2.500000e+00 : f32
    %173 = vector.broadcast %cst_54 : f32 to vector<8x128xf32>
    %174 = arith.mulf %172, %173 : vector<8x128xf32>
    %cst_55 = arith.constant -2.200000e+00 : f32
    %175 = vector.broadcast %cst_55 : f32 to vector<8x128xf32>
    %176 = arith.subf %0, %175 : vector<8x128xf32>
    %177 = arith.mulf %176, %93 : vector<8x128xf32>
    %cst_56 = arith.constant -1.000000e+00 : f32
    %178 = vector.broadcast %cst_56 : f32 to vector<8x128xf32>
    %179 = arith.subf %178, %0 : vector<8x128xf32>
    %180 = arith.mulf %179, %102 : vector<8x128xf32>
    %181 = arith.addf %177, %180 : vector<8x128xf32>
    %cst_57 = arith.constant 1.250000e+00 : f32
    %182 = vector.broadcast %cst_57 : f32 to vector<8x128xf32>
    %183 = arith.mulf %181, %182 : vector<8x128xf32>
    %cst_58 = arith.constant -1.800000e+00 : f32
    %184 = vector.broadcast %cst_58 : f32 to vector<8x128xf32>
    %185 = arith.subf %0, %184 : vector<8x128xf32>
    %186 = arith.mulf %185, %102 : vector<8x128xf32>
    %cst_59 = arith.constant -6.000000e-01 : f32
    %187 = vector.broadcast %cst_59 : f32 to vector<8x128xf32>
    %188 = arith.subf %187, %0 : vector<8x128xf32>
    %189 = arith.mulf %188, %111 : vector<8x128xf32>
    %190 = arith.addf %186, %189 : vector<8x128xf32>
    %cst_60 = arith.constant 1.250000e+00 : f32
    %191 = vector.broadcast %cst_60 : f32 to vector<8x128xf32>
    %192 = arith.mulf %190, %191 : vector<8x128xf32>
    %cst_61 = arith.constant -1.400000e+00 : f32
    %193 = vector.broadcast %cst_61 : f32 to vector<8x128xf32>
    %194 = arith.subf %0, %193 : vector<8x128xf32>
    %195 = arith.mulf %194, %111 : vector<8x128xf32>
    %cst_62 = arith.constant -2.000000e-01 : f32
    %196 = vector.broadcast %cst_62 : f32 to vector<8x128xf32>
    %197 = arith.subf %196, %0 : vector<8x128xf32>
    %198 = arith.mulf %197, %120 : vector<8x128xf32>
    %199 = arith.addf %195, %198 : vector<8x128xf32>
    %cst_63 = arith.constant 1.250000e+00 : f32
    %200 = vector.broadcast %cst_63 : f32 to vector<8x128xf32>
    %201 = arith.mulf %199, %200 : vector<8x128xf32>
    %cst_64 = arith.constant -1.000000e+00 : f32
    %202 = vector.broadcast %cst_64 : f32 to vector<8x128xf32>
    %203 = arith.subf %0, %202 : vector<8x128xf32>
    %204 = arith.mulf %203, %120 : vector<8x128xf32>
    %cst_65 = arith.constant 2.000000e-01 : f32
    %205 = vector.broadcast %cst_65 : f32 to vector<8x128xf32>
    %206 = arith.subf %205, %0 : vector<8x128xf32>
    %207 = arith.mulf %206, %129 : vector<8x128xf32>
    %208 = arith.addf %204, %207 : vector<8x128xf32>
    %cst_66 = arith.constant 1.250000e+00 : f32
    %209 = vector.broadcast %cst_66 : f32 to vector<8x128xf32>
    %210 = arith.mulf %208, %209 : vector<8x128xf32>
    %cst_67 = arith.constant -6.000000e-01 : f32
    %211 = vector.broadcast %cst_67 : f32 to vector<8x128xf32>
    %212 = arith.subf %0, %211 : vector<8x128xf32>
    %213 = arith.mulf %212, %129 : vector<8x128xf32>
    %cst_68 = arith.constant 6.000000e-01 : f32
    %214 = vector.broadcast %cst_68 : f32 to vector<8x128xf32>
    %215 = arith.subf %214, %0 : vector<8x128xf32>
    %216 = arith.mulf %215, %138 : vector<8x128xf32>
    %217 = arith.addf %213, %216 : vector<8x128xf32>
    %cst_69 = arith.constant 1.250000e+00 : f32
    %218 = vector.broadcast %cst_69 : f32 to vector<8x128xf32>
    %219 = arith.mulf %217, %218 : vector<8x128xf32>
    %cst_70 = arith.constant -2.000000e-01 : f32
    %220 = vector.broadcast %cst_70 : f32 to vector<8x128xf32>
    %221 = arith.subf %0, %220 : vector<8x128xf32>
    %222 = arith.mulf %221, %138 : vector<8x128xf32>
    %cst_71 = arith.constant 1.000000e+00 : f32
    %223 = vector.broadcast %cst_71 : f32 to vector<8x128xf32>
    %224 = arith.subf %223, %0 : vector<8x128xf32>
    %225 = arith.mulf %224, %147 : vector<8x128xf32>
    %226 = arith.addf %222, %225 : vector<8x128xf32>
    %cst_72 = arith.constant 1.250000e+00 : f32
    %227 = vector.broadcast %cst_72 : f32 to vector<8x128xf32>
    %228 = arith.mulf %226, %227 : vector<8x128xf32>
    %cst_73 = arith.constant 2.000000e-01 : f32
    %229 = vector.broadcast %cst_73 : f32 to vector<8x128xf32>
    %230 = arith.subf %0, %229 : vector<8x128xf32>
    %231 = arith.mulf %230, %147 : vector<8x128xf32>
    %cst_74 = arith.constant 1.400000e+00 : f32
    %232 = vector.broadcast %cst_74 : f32 to vector<8x128xf32>
    %233 = arith.subf %232, %0 : vector<8x128xf32>
    %234 = arith.mulf %233, %156 : vector<8x128xf32>
    %235 = arith.addf %231, %234 : vector<8x128xf32>
    %cst_75 = arith.constant 1.250000e+00 : f32
    %236 = vector.broadcast %cst_75 : f32 to vector<8x128xf32>
    %237 = arith.mulf %235, %236 : vector<8x128xf32>
    %cst_76 = arith.constant 6.000000e-01 : f32
    %238 = vector.broadcast %cst_76 : f32 to vector<8x128xf32>
    %239 = arith.subf %0, %238 : vector<8x128xf32>
    %240 = arith.mulf %239, %156 : vector<8x128xf32>
    %cst_77 = arith.constant 1.800000e+00 : f32
    %241 = vector.broadcast %cst_77 : f32 to vector<8x128xf32>
    %242 = arith.subf %241, %0 : vector<8x128xf32>
    %243 = arith.mulf %242, %165 : vector<8x128xf32>
    %244 = arith.addf %240, %243 : vector<8x128xf32>
    %cst_78 = arith.constant 1.250000e+00 : f32
    %245 = vector.broadcast %cst_78 : f32 to vector<8x128xf32>
    %246 = arith.mulf %244, %245 : vector<8x128xf32>
    %cst_79 = arith.constant 1.000000e+00 : f32
    %247 = vector.broadcast %cst_79 : f32 to vector<8x128xf32>
    %248 = arith.subf %0, %247 : vector<8x128xf32>
    %249 = arith.mulf %248, %165 : vector<8x128xf32>
    %cst_80 = arith.constant 2.200000e+00 : f32
    %250 = vector.broadcast %cst_80 : f32 to vector<8x128xf32>
    %251 = arith.subf %250, %0 : vector<8x128xf32>
    %252 = arith.mulf %251, %174 : vector<8x128xf32>
    %253 = arith.addf %249, %252 : vector<8x128xf32>
    %cst_81 = arith.constant 1.250000e+00 : f32
    %254 = vector.broadcast %cst_81 : f32 to vector<8x128xf32>
    %255 = arith.mulf %253, %254 : vector<8x128xf32>
    %cst_82 = arith.constant -2.200000e+00 : f32
    %256 = vector.broadcast %cst_82 : f32 to vector<8x128xf32>
    %257 = arith.subf %0, %256 : vector<8x128xf32>
    %258 = arith.mulf %257, %183 : vector<8x128xf32>
    %cst_83 = arith.constant -6.000000e-01 : f32
    %259 = vector.broadcast %cst_83 : f32 to vector<8x128xf32>
    %260 = arith.subf %259, %0 : vector<8x128xf32>
    %261 = arith.mulf %260, %192 : vector<8x128xf32>
    %262 = arith.addf %258, %261 : vector<8x128xf32>
    %cst_84 = arith.constant 0.833333313 : f32
    %263 = vector.broadcast %cst_84 : f32 to vector<8x128xf32>
    %264 = arith.mulf %262, %263 : vector<8x128xf32>
    %cst_85 = arith.constant -1.800000e+00 : f32
    %265 = vector.broadcast %cst_85 : f32 to vector<8x128xf32>
    %266 = arith.subf %0, %265 : vector<8x128xf32>
    %267 = arith.mulf %266, %192 : vector<8x128xf32>
    %cst_86 = arith.constant -2.000000e-01 : f32
    %268 = vector.broadcast %cst_86 : f32 to vector<8x128xf32>
    %269 = arith.subf %268, %0 : vector<8x128xf32>
    %270 = arith.mulf %269, %201 : vector<8x128xf32>
    %271 = arith.addf %267, %270 : vector<8x128xf32>
    %cst_87 = arith.constant 0.833333313 : f32
    %272 = vector.broadcast %cst_87 : f32 to vector<8x128xf32>
    %273 = arith.mulf %271, %272 : vector<8x128xf32>
    %cst_88 = arith.constant -1.400000e+00 : f32
    %274 = vector.broadcast %cst_88 : f32 to vector<8x128xf32>
    %275 = arith.subf %0, %274 : vector<8x128xf32>
    %276 = arith.mulf %275, %201 : vector<8x128xf32>
    %cst_89 = arith.constant 2.000000e-01 : f32
    %277 = vector.broadcast %cst_89 : f32 to vector<8x128xf32>
    %278 = arith.subf %277, %0 : vector<8x128xf32>
    %279 = arith.mulf %278, %210 : vector<8x128xf32>
    %280 = arith.addf %276, %279 : vector<8x128xf32>
    %cst_90 = arith.constant 0.833333313 : f32
    %281 = vector.broadcast %cst_90 : f32 to vector<8x128xf32>
    %282 = arith.mulf %280, %281 : vector<8x128xf32>
    %cst_91 = arith.constant -1.000000e+00 : f32
    %283 = vector.broadcast %cst_91 : f32 to vector<8x128xf32>
    %284 = arith.subf %0, %283 : vector<8x128xf32>
    %285 = arith.mulf %284, %210 : vector<8x128xf32>
    %cst_92 = arith.constant 6.000000e-01 : f32
    %286 = vector.broadcast %cst_92 : f32 to vector<8x128xf32>
    %287 = arith.subf %286, %0 : vector<8x128xf32>
    %288 = arith.mulf %287, %219 : vector<8x128xf32>
    %289 = arith.addf %285, %288 : vector<8x128xf32>
    %cst_93 = arith.constant 0.833333313 : f32
    %290 = vector.broadcast %cst_93 : f32 to vector<8x128xf32>
    %291 = arith.mulf %289, %290 : vector<8x128xf32>
    %cst_94 = arith.constant -6.000000e-01 : f32
    %292 = vector.broadcast %cst_94 : f32 to vector<8x128xf32>
    %293 = arith.subf %0, %292 : vector<8x128xf32>
    %294 = arith.mulf %293, %219 : vector<8x128xf32>
    %cst_95 = arith.constant 1.000000e+00 : f32
    %295 = vector.broadcast %cst_95 : f32 to vector<8x128xf32>
    %296 = arith.subf %295, %0 : vector<8x128xf32>
    %297 = arith.mulf %296, %228 : vector<8x128xf32>
    %298 = arith.addf %294, %297 : vector<8x128xf32>
    %cst_96 = arith.constant 0.833333313 : f32
    %299 = vector.broadcast %cst_96 : f32 to vector<8x128xf32>
    %300 = arith.mulf %298, %299 : vector<8x128xf32>
    %cst_97 = arith.constant -2.000000e-01 : f32
    %301 = vector.broadcast %cst_97 : f32 to vector<8x128xf32>
    %302 = arith.subf %0, %301 : vector<8x128xf32>
    %303 = arith.mulf %302, %228 : vector<8x128xf32>
    %cst_98 = arith.constant 1.400000e+00 : f32
    %304 = vector.broadcast %cst_98 : f32 to vector<8x128xf32>
    %305 = arith.subf %304, %0 : vector<8x128xf32>
    %306 = arith.mulf %305, %237 : vector<8x128xf32>
    %307 = arith.addf %303, %306 : vector<8x128xf32>
    %cst_99 = arith.constant 0.833333313 : f32
    %308 = vector.broadcast %cst_99 : f32 to vector<8x128xf32>
    %309 = arith.mulf %307, %308 : vector<8x128xf32>
    %cst_100 = arith.constant 2.000000e-01 : f32
    %310 = vector.broadcast %cst_100 : f32 to vector<8x128xf32>
    %311 = arith.subf %0, %310 : vector<8x128xf32>
    %312 = arith.mulf %311, %237 : vector<8x128xf32>
    %cst_101 = arith.constant 1.800000e+00 : f32
    %313 = vector.broadcast %cst_101 : f32 to vector<8x128xf32>
    %314 = arith.subf %313, %0 : vector<8x128xf32>
    %315 = arith.mulf %314, %246 : vector<8x128xf32>
    %316 = arith.addf %312, %315 : vector<8x128xf32>
    %cst_102 = arith.constant 0.833333313 : f32
    %317 = vector.broadcast %cst_102 : f32 to vector<8x128xf32>
    %318 = arith.mulf %316, %317 : vector<8x128xf32>
    %cst_103 = arith.constant 6.000000e-01 : f32
    %319 = vector.broadcast %cst_103 : f32 to vector<8x128xf32>
    %320 = arith.subf %0, %319 : vector<8x128xf32>
    %321 = arith.mulf %320, %246 : vector<8x128xf32>
    %cst_104 = arith.constant 2.200000e+00 : f32
    %322 = vector.broadcast %cst_104 : f32 to vector<8x128xf32>
    %323 = arith.subf %322, %0 : vector<8x128xf32>
    %324 = arith.mulf %323, %255 : vector<8x128xf32>
    %325 = arith.addf %321, %324 : vector<8x128xf32>
    %cst_105 = arith.constant 0.833333313 : f32
    %326 = vector.broadcast %cst_105 : f32 to vector<8x128xf32>
    %327 = arith.mulf %325, %326 : vector<8x128xf32>
    %328 = tpu.concatenate %7, %264, %273, %282, %291, %300, %309, %318, %327 in 1 : vector<8x128xf32>, vector<8x128xf32>, vector<8x128xf32>, vector<8x128xf32>, vector<8x128xf32>, vector<8x128xf32>, vector<8x128xf32>, vector<8x128xf32>, vector<8x128xf32> -> vector<8x1152xf32>
    %cst_106 = arith.constant dense<0.000000e+00> : vector<8x128xf32>
    %329 = tpu.matmul %328, %1, %cst_106 {dimension_numbers = #tpu.dot_dimension_numbers<[1], [0], [0], [1], [0, 0, 1, 1], [], []>} : vector<8x1152xf32>, vector<1152x128xf32>, vector<8x128xf32> -> vector<8x128xf32>
    %c0_107 = arith.constant 0 : index
    %c0_108 = arith.constant 0 : index
    %330 = vector.load %arg3[%c0_107, %c0_108] : memref<1152x128xf32, #tpu.memory_space<vmem>>, vector<1152x128xf32>
    %331 = arith.negf %329 : vector<8x128xf32>
    %332 = math.exp %331 : vector<8x128xf32>
    %cst_109 = arith.constant 1.000000e+00 : f32
    %333 = vector.broadcast %cst_109 : f32 to vector<8x128xf32>
    %334 = arith.addf %333, %332 : vector<8x128xf32>
    %335 = arith.divf %333, %334 : vector<8x128xf32>
    %336 = arith.mulf %329, %335 : vector<8x128xf32>
    %cst_110 = arith.constant -2.200000e+00 : f32
    %337 = vector.broadcast %cst_110 : f32 to vector<8x128xf32>
    %338 = arith.cmpf oge, %329, %337 : vector<8x128xf32>
    %cst_111 = arith.constant -1.800000e+00 : f32
    %339 = vector.broadcast %cst_111 : f32 to vector<8x128xf32>
    %340 = arith.cmpf olt, %329, %339 : vector<8x128xf32>
    %341 = arith.andi %338, %340 : vector<8x128xi1>
    %342 = arith.extui %341 : vector<8x128xi1> to vector<8x128xi32>
    %343 = arith.sitofp %342 : vector<8x128xi32> to vector<8x128xf32>
    %cst_112 = arith.constant -1.800000e+00 : f32
    %344 = vector.broadcast %cst_112 : f32 to vector<8x128xf32>
    %345 = arith.cmpf oge, %329, %344 : vector<8x128xf32>
    %cst_113 = arith.constant -1.400000e+00 : f32
    %346 = vector.broadcast %cst_113 : f32 to vector<8x128xf32>
    %347 = arith.cmpf olt, %329, %346 : vector<8x128xf32>
    %348 = arith.andi %345, %347 : vector<8x128xi1>
    %349 = arith.extui %348 : vector<8x128xi1> to vector<8x128xi32>
    %350 = arith.sitofp %349 : vector<8x128xi32> to vector<8x128xf32>
    %cst_114 = arith.constant -1.400000e+00 : f32
    %351 = vector.broadcast %cst_114 : f32 to vector<8x128xf32>
    %352 = arith.cmpf oge, %329, %351 : vector<8x128xf32>
    %cst_115 = arith.constant -1.000000e+00 : f32
    %353 = vector.broadcast %cst_115 : f32 to vector<8x128xf32>
    %354 = arith.cmpf olt, %329, %353 : vector<8x128xf32>
    %355 = arith.andi %352, %354 : vector<8x128xi1>
    %356 = arith.extui %355 : vector<8x128xi1> to vector<8x128xi32>
    %357 = arith.sitofp %356 : vector<8x128xi32> to vector<8x128xf32>
    %cst_116 = arith.constant -1.000000e+00 : f32
    %358 = vector.broadcast %cst_116 : f32 to vector<8x128xf32>
    %359 = arith.cmpf oge, %329, %358 : vector<8x128xf32>
    %cst_117 = arith.constant -6.000000e-01 : f32
    %360 = vector.broadcast %cst_117 : f32 to vector<8x128xf32>
    %361 = arith.cmpf olt, %329, %360 : vector<8x128xf32>
    %362 = arith.andi %359, %361 : vector<8x128xi1>
    %363 = arith.extui %362 : vector<8x128xi1> to vector<8x128xi32>
    %364 = arith.sitofp %363 : vector<8x128xi32> to vector<8x128xf32>
    %cst_118 = arith.constant -6.000000e-01 : f32
    %365 = vector.broadcast %cst_118 : f32 to vector<8x128xf32>
    %366 = arith.cmpf oge, %329, %365 : vector<8x128xf32>
    %cst_119 = arith.constant -2.000000e-01 : f32
    %367 = vector.broadcast %cst_119 : f32 to vector<8x128xf32>
    %368 = arith.cmpf olt, %329, %367 : vector<8x128xf32>
    %369 = arith.andi %366, %368 : vector<8x128xi1>
    %370 = arith.extui %369 : vector<8x128xi1> to vector<8x128xi32>
    %371 = arith.sitofp %370 : vector<8x128xi32> to vector<8x128xf32>
    %cst_120 = arith.constant -2.000000e-01 : f32
    %372 = vector.broadcast %cst_120 : f32 to vector<8x128xf32>
    %373 = arith.cmpf oge, %329, %372 : vector<8x128xf32>
    %cst_121 = arith.constant 2.000000e-01 : f32
    %374 = vector.broadcast %cst_121 : f32 to vector<8x128xf32>
    %375 = arith.cmpf olt, %329, %374 : vector<8x128xf32>
    %376 = arith.andi %373, %375 : vector<8x128xi1>
    %377 = arith.extui %376 : vector<8x128xi1> to vector<8x128xi32>
    %378 = arith.sitofp %377 : vector<8x128xi32> to vector<8x128xf32>
    %cst_122 = arith.constant 2.000000e-01 : f32
    %379 = vector.broadcast %cst_122 : f32 to vector<8x128xf32>
    %380 = arith.cmpf oge, %329, %379 : vector<8x128xf32>
    %cst_123 = arith.constant 6.000000e-01 : f32
    %381 = vector.broadcast %cst_123 : f32 to vector<8x128xf32>
    %382 = arith.cmpf olt, %329, %381 : vector<8x128xf32>
    %383 = arith.andi %380, %382 : vector<8x128xi1>
    %384 = arith.extui %383 : vector<8x128xi1> to vector<8x128xi32>
    %385 = arith.sitofp %384 : vector<8x128xi32> to vector<8x128xf32>
    %cst_124 = arith.constant 6.000000e-01 : f32
    %386 = vector.broadcast %cst_124 : f32 to vector<8x128xf32>
    %387 = arith.cmpf oge, %329, %386 : vector<8x128xf32>
    %cst_125 = arith.constant 1.000000e+00 : f32
    %388 = vector.broadcast %cst_125 : f32 to vector<8x128xf32>
    %389 = arith.cmpf olt, %329, %388 : vector<8x128xf32>
    %390 = arith.andi %387, %389 : vector<8x128xi1>
    %391 = arith.extui %390 : vector<8x128xi1> to vector<8x128xi32>
    %392 = arith.sitofp %391 : vector<8x128xi32> to vector<8x128xf32>
    %cst_126 = arith.constant 1.000000e+00 : f32
    %393 = vector.broadcast %cst_126 : f32 to vector<8x128xf32>
    %394 = arith.cmpf oge, %329, %393 : vector<8x128xf32>
    %cst_127 = arith.constant 1.400000e+00 : f32
    %395 = vector.broadcast %cst_127 : f32 to vector<8x128xf32>
    %396 = arith.cmpf olt, %329, %395 : vector<8x128xf32>
    %397 = arith.andi %394, %396 : vector<8x128xi1>
    %398 = arith.extui %397 : vector<8x128xi1> to vector<8x128xi32>
    %399 = arith.sitofp %398 : vector<8x128xi32> to vector<8x128xf32>
    %cst_128 = arith.constant 1.400000e+00 : f32
    %400 = vector.broadcast %cst_128 : f32 to vector<8x128xf32>
    %401 = arith.cmpf oge, %329, %400 : vector<8x128xf32>
    %cst_129 = arith.constant 1.800000e+00 : f32
    %402 = vector.broadcast %cst_129 : f32 to vector<8x128xf32>
    %403 = arith.cmpf olt, %329, %402 : vector<8x128xf32>
    %404 = arith.andi %401, %403 : vector<8x128xi1>
    %405 = arith.extui %404 : vector<8x128xi1> to vector<8x128xi32>
    %406 = arith.sitofp %405 : vector<8x128xi32> to vector<8x128xf32>
    %cst_130 = arith.constant 1.800000e+00 : f32
    %407 = vector.broadcast %cst_130 : f32 to vector<8x128xf32>
    %408 = arith.cmpf oge, %329, %407 : vector<8x128xf32>
    %cst_131 = arith.constant 2.200000e+00 : f32
    %409 = vector.broadcast %cst_131 : f32 to vector<8x128xf32>
    %410 = arith.cmpf olt, %329, %409 : vector<8x128xf32>
    %411 = arith.andi %408, %410 : vector<8x128xi1>
    %412 = arith.extui %411 : vector<8x128xi1> to vector<8x128xi32>
    %413 = arith.sitofp %412 : vector<8x128xi32> to vector<8x128xf32>
    %cst_132 = arith.constant -2.200000e+00 : f32
    %414 = vector.broadcast %cst_132 : f32 to vector<8x128xf32>
    %415 = arith.subf %329, %414 : vector<8x128xf32>
    %416 = arith.mulf %415, %343 : vector<8x128xf32>
    %cst_133 = arith.constant -1.400000e+00 : f32
    %417 = vector.broadcast %cst_133 : f32 to vector<8x128xf32>
    %418 = arith.subf %417, %329 : vector<8x128xf32>
    %419 = arith.mulf %418, %350 : vector<8x128xf32>
    %420 = arith.addf %416, %419 : vector<8x128xf32>
    %cst_134 = arith.constant 2.500000e+00 : f32
    %421 = vector.broadcast %cst_134 : f32 to vector<8x128xf32>
    %422 = arith.mulf %420, %421 : vector<8x128xf32>
    %cst_135 = arith.constant -1.800000e+00 : f32
    %423 = vector.broadcast %cst_135 : f32 to vector<8x128xf32>
    %424 = arith.subf %329, %423 : vector<8x128xf32>
    %425 = arith.mulf %424, %350 : vector<8x128xf32>
    %cst_136 = arith.constant -1.000000e+00 : f32
    %426 = vector.broadcast %cst_136 : f32 to vector<8x128xf32>
    %427 = arith.subf %426, %329 : vector<8x128xf32>
    %428 = arith.mulf %427, %357 : vector<8x128xf32>
    %429 = arith.addf %425, %428 : vector<8x128xf32>
    %cst_137 = arith.constant 2.500000e+00 : f32
    %430 = vector.broadcast %cst_137 : f32 to vector<8x128xf32>
    %431 = arith.mulf %429, %430 : vector<8x128xf32>
    %cst_138 = arith.constant -1.400000e+00 : f32
    %432 = vector.broadcast %cst_138 : f32 to vector<8x128xf32>
    %433 = arith.subf %329, %432 : vector<8x128xf32>
    %434 = arith.mulf %433, %357 : vector<8x128xf32>
    %cst_139 = arith.constant -6.000000e-01 : f32
    %435 = vector.broadcast %cst_139 : f32 to vector<8x128xf32>
    %436 = arith.subf %435, %329 : vector<8x128xf32>
    %437 = arith.mulf %436, %364 : vector<8x128xf32>
    %438 = arith.addf %434, %437 : vector<8x128xf32>
    %cst_140 = arith.constant 2.500000e+00 : f32
    %439 = vector.broadcast %cst_140 : f32 to vector<8x128xf32>
    %440 = arith.mulf %438, %439 : vector<8x128xf32>
    %cst_141 = arith.constant -1.000000e+00 : f32
    %441 = vector.broadcast %cst_141 : f32 to vector<8x128xf32>
    %442 = arith.subf %329, %441 : vector<8x128xf32>
    %443 = arith.mulf %442, %364 : vector<8x128xf32>
    %cst_142 = arith.constant -2.000000e-01 : f32
    %444 = vector.broadcast %cst_142 : f32 to vector<8x128xf32>
    %445 = arith.subf %444, %329 : vector<8x128xf32>
    %446 = arith.mulf %445, %371 : vector<8x128xf32>
    %447 = arith.addf %443, %446 : vector<8x128xf32>
    %cst_143 = arith.constant 2.500000e+00 : f32
    %448 = vector.broadcast %cst_143 : f32 to vector<8x128xf32>
    %449 = arith.mulf %447, %448 : vector<8x128xf32>
    %cst_144 = arith.constant -6.000000e-01 : f32
    %450 = vector.broadcast %cst_144 : f32 to vector<8x128xf32>
    %451 = arith.subf %329, %450 : vector<8x128xf32>
    %452 = arith.mulf %451, %371 : vector<8x128xf32>
    %cst_145 = arith.constant 2.000000e-01 : f32
    %453 = vector.broadcast %cst_145 : f32 to vector<8x128xf32>
    %454 = arith.subf %453, %329 : vector<8x128xf32>
    %455 = arith.mulf %454, %378 : vector<8x128xf32>
    %456 = arith.addf %452, %455 : vector<8x128xf32>
    %cst_146 = arith.constant 2.500000e+00 : f32
    %457 = vector.broadcast %cst_146 : f32 to vector<8x128xf32>
    %458 = arith.mulf %456, %457 : vector<8x128xf32>
    %cst_147 = arith.constant -2.000000e-01 : f32
    %459 = vector.broadcast %cst_147 : f32 to vector<8x128xf32>
    %460 = arith.subf %329, %459 : vector<8x128xf32>
    %461 = arith.mulf %460, %378 : vector<8x128xf32>
    %cst_148 = arith.constant 6.000000e-01 : f32
    %462 = vector.broadcast %cst_148 : f32 to vector<8x128xf32>
    %463 = arith.subf %462, %329 : vector<8x128xf32>
    %464 = arith.mulf %463, %385 : vector<8x128xf32>
    %465 = arith.addf %461, %464 : vector<8x128xf32>
    %cst_149 = arith.constant 2.500000e+00 : f32
    %466 = vector.broadcast %cst_149 : f32 to vector<8x128xf32>
    %467 = arith.mulf %465, %466 : vector<8x128xf32>
    %cst_150 = arith.constant 2.000000e-01 : f32
    %468 = vector.broadcast %cst_150 : f32 to vector<8x128xf32>
    %469 = arith.subf %329, %468 : vector<8x128xf32>
    %470 = arith.mulf %469, %385 : vector<8x128xf32>
    %cst_151 = arith.constant 1.000000e+00 : f32
    %471 = vector.broadcast %cst_151 : f32 to vector<8x128xf32>
    %472 = arith.subf %471, %329 : vector<8x128xf32>
    %473 = arith.mulf %472, %392 : vector<8x128xf32>
    %474 = arith.addf %470, %473 : vector<8x128xf32>
    %cst_152 = arith.constant 2.500000e+00 : f32
    %475 = vector.broadcast %cst_152 : f32 to vector<8x128xf32>
    %476 = arith.mulf %474, %475 : vector<8x128xf32>
    %cst_153 = arith.constant 6.000000e-01 : f32
    %477 = vector.broadcast %cst_153 : f32 to vector<8x128xf32>
    %478 = arith.subf %329, %477 : vector<8x128xf32>
    %479 = arith.mulf %478, %392 : vector<8x128xf32>
    %cst_154 = arith.constant 1.400000e+00 : f32
    %480 = vector.broadcast %cst_154 : f32 to vector<8x128xf32>
    %481 = arith.subf %480, %329 : vector<8x128xf32>
    %482 = arith.mulf %481, %399 : vector<8x128xf32>
    %483 = arith.addf %479, %482 : vector<8x128xf32>
    %cst_155 = arith.constant 2.500000e+00 : f32
    %484 = vector.broadcast %cst_155 : f32 to vector<8x128xf32>
    %485 = arith.mulf %483, %484 : vector<8x128xf32>
    %cst_156 = arith.constant 1.000000e+00 : f32
    %486 = vector.broadcast %cst_156 : f32 to vector<8x128xf32>
    %487 = arith.subf %329, %486 : vector<8x128xf32>
    %488 = arith.mulf %487, %399 : vector<8x128xf32>
    %cst_157 = arith.constant 1.800000e+00 : f32
    %489 = vector.broadcast %cst_157 : f32 to vector<8x128xf32>
    %490 = arith.subf %489, %329 : vector<8x128xf32>
    %491 = arith.mulf %490, %406 : vector<8x128xf32>
    %492 = arith.addf %488, %491 : vector<8x128xf32>
    %cst_158 = arith.constant 2.500000e+00 : f32
    %493 = vector.broadcast %cst_158 : f32 to vector<8x128xf32>
    %494 = arith.mulf %492, %493 : vector<8x128xf32>
    %cst_159 = arith.constant 1.400000e+00 : f32
    %495 = vector.broadcast %cst_159 : f32 to vector<8x128xf32>
    %496 = arith.subf %329, %495 : vector<8x128xf32>
    %497 = arith.mulf %496, %406 : vector<8x128xf32>
    %cst_160 = arith.constant 2.200000e+00 : f32
    %498 = vector.broadcast %cst_160 : f32 to vector<8x128xf32>
    %499 = arith.subf %498, %329 : vector<8x128xf32>
    %500 = arith.mulf %499, %413 : vector<8x128xf32>
    %501 = arith.addf %497, %500 : vector<8x128xf32>
    %cst_161 = arith.constant 2.500000e+00 : f32
    %502 = vector.broadcast %cst_161 : f32 to vector<8x128xf32>
    %503 = arith.mulf %501, %502 : vector<8x128xf32>
    %cst_162 = arith.constant -2.200000e+00 : f32
    %504 = vector.broadcast %cst_162 : f32 to vector<8x128xf32>
    %505 = arith.subf %329, %504 : vector<8x128xf32>
    %506 = arith.mulf %505, %422 : vector<8x128xf32>
    %cst_163 = arith.constant -1.000000e+00 : f32
    %507 = vector.broadcast %cst_163 : f32 to vector<8x128xf32>
    %508 = arith.subf %507, %329 : vector<8x128xf32>
    %509 = arith.mulf %508, %431 : vector<8x128xf32>
    %510 = arith.addf %506, %509 : vector<8x128xf32>
    %cst_164 = arith.constant 1.250000e+00 : f32
    %511 = vector.broadcast %cst_164 : f32 to vector<8x128xf32>
    %512 = arith.mulf %510, %511 : vector<8x128xf32>
    %cst_165 = arith.constant -1.800000e+00 : f32
    %513 = vector.broadcast %cst_165 : f32 to vector<8x128xf32>
    %514 = arith.subf %329, %513 : vector<8x128xf32>
    %515 = arith.mulf %514, %431 : vector<8x128xf32>
    %cst_166 = arith.constant -6.000000e-01 : f32
    %516 = vector.broadcast %cst_166 : f32 to vector<8x128xf32>
    %517 = arith.subf %516, %329 : vector<8x128xf32>
    %518 = arith.mulf %517, %440 : vector<8x128xf32>
    %519 = arith.addf %515, %518 : vector<8x128xf32>
    %cst_167 = arith.constant 1.250000e+00 : f32
    %520 = vector.broadcast %cst_167 : f32 to vector<8x128xf32>
    %521 = arith.mulf %519, %520 : vector<8x128xf32>
    %cst_168 = arith.constant -1.400000e+00 : f32
    %522 = vector.broadcast %cst_168 : f32 to vector<8x128xf32>
    %523 = arith.subf %329, %522 : vector<8x128xf32>
    %524 = arith.mulf %523, %440 : vector<8x128xf32>
    %cst_169 = arith.constant -2.000000e-01 : f32
    %525 = vector.broadcast %cst_169 : f32 to vector<8x128xf32>
    %526 = arith.subf %525, %329 : vector<8x128xf32>
    %527 = arith.mulf %526, %449 : vector<8x128xf32>
    %528 = arith.addf %524, %527 : vector<8x128xf32>
    %cst_170 = arith.constant 1.250000e+00 : f32
    %529 = vector.broadcast %cst_170 : f32 to vector<8x128xf32>
    %530 = arith.mulf %528, %529 : vector<8x128xf32>
    %cst_171 = arith.constant -1.000000e+00 : f32
    %531 = vector.broadcast %cst_171 : f32 to vector<8x128xf32>
    %532 = arith.subf %329, %531 : vector<8x128xf32>
    %533 = arith.mulf %532, %449 : vector<8x128xf32>
    %cst_172 = arith.constant 2.000000e-01 : f32
    %534 = vector.broadcast %cst_172 : f32 to vector<8x128xf32>
    %535 = arith.subf %534, %329 : vector<8x128xf32>
    %536 = arith.mulf %535, %458 : vector<8x128xf32>
    %537 = arith.addf %533, %536 : vector<8x128xf32>
    %cst_173 = arith.constant 1.250000e+00 : f32
    %538 = vector.broadcast %cst_173 : f32 to vector<8x128xf32>
    %539 = arith.mulf %537, %538 : vector<8x128xf32>
    %cst_174 = arith.constant -6.000000e-01 : f32
    %540 = vector.broadcast %cst_174 : f32 to vector<8x128xf32>
    %541 = arith.subf %329, %540 : vector<8x128xf32>
    %542 = arith.mulf %541, %458 : vector<8x128xf32>
    %cst_175 = arith.constant 6.000000e-01 : f32
    %543 = vector.broadcast %cst_175 : f32 to vector<8x128xf32>
    %544 = arith.subf %543, %329 : vector<8x128xf32>
    %545 = arith.mulf %544, %467 : vector<8x128xf32>
    %546 = arith.addf %542, %545 : vector<8x128xf32>
    %cst_176 = arith.constant 1.250000e+00 : f32
    %547 = vector.broadcast %cst_176 : f32 to vector<8x128xf32>
    %548 = arith.mulf %546, %547 : vector<8x128xf32>
    %cst_177 = arith.constant -2.000000e-01 : f32
    %549 = vector.broadcast %cst_177 : f32 to vector<8x128xf32>
    %550 = arith.subf %329, %549 : vector<8x128xf32>
    %551 = arith.mulf %550, %467 : vector<8x128xf32>
    %cst_178 = arith.constant 1.000000e+00 : f32
    %552 = vector.broadcast %cst_178 : f32 to vector<8x128xf32>
    %553 = arith.subf %552, %329 : vector<8x128xf32>
    %554 = arith.mulf %553, %476 : vector<8x128xf32>
    %555 = arith.addf %551, %554 : vector<8x128xf32>
    %cst_179 = arith.constant 1.250000e+00 : f32
    %556 = vector.broadcast %cst_179 : f32 to vector<8x128xf32>
    %557 = arith.mulf %555, %556 : vector<8x128xf32>
    %cst_180 = arith.constant 2.000000e-01 : f32
    %558 = vector.broadcast %cst_180 : f32 to vector<8x128xf32>
    %559 = arith.subf %329, %558 : vector<8x128xf32>
    %560 = arith.mulf %559, %476 : vector<8x128xf32>
    %cst_181 = arith.constant 1.400000e+00 : f32
    %561 = vector.broadcast %cst_181 : f32 to vector<8x128xf32>
    %562 = arith.subf %561, %329 : vector<8x128xf32>
    %563 = arith.mulf %562, %485 : vector<8x128xf32>
    %564 = arith.addf %560, %563 : vector<8x128xf32>
    %cst_182 = arith.constant 1.250000e+00 : f32
    %565 = vector.broadcast %cst_182 : f32 to vector<8x128xf32>
    %566 = arith.mulf %564, %565 : vector<8x128xf32>
    %cst_183 = arith.constant 6.000000e-01 : f32
    %567 = vector.broadcast %cst_183 : f32 to vector<8x128xf32>
    %568 = arith.subf %329, %567 : vector<8x128xf32>
    %569 = arith.mulf %568, %485 : vector<8x128xf32>
    %cst_184 = arith.constant 1.800000e+00 : f32
    %570 = vector.broadcast %cst_184 : f32 to vector<8x128xf32>
    %571 = arith.subf %570, %329 : vector<8x128xf32>
    %572 = arith.mulf %571, %494 : vector<8x128xf32>
    %573 = arith.addf %569, %572 : vector<8x128xf32>
    %cst_185 = arith.constant 1.250000e+00 : f32
    %574 = vector.broadcast %cst_185 : f32 to vector<8x128xf32>
    %575 = arith.mulf %573, %574 : vector<8x128xf32>
    %cst_186 = arith.constant 1.000000e+00 : f32
    %576 = vector.broadcast %cst_186 : f32 to vector<8x128xf32>
    %577 = arith.subf %329, %576 : vector<8x128xf32>
    %578 = arith.mulf %577, %494 : vector<8x128xf32>
    %cst_187 = arith.constant 2.200000e+00 : f32
    %579 = vector.broadcast %cst_187 : f32 to vector<8x128xf32>
    %580 = arith.subf %579, %329 : vector<8x128xf32>
    %581 = arith.mulf %580, %503 : vector<8x128xf32>
    %582 = arith.addf %578, %581 : vector<8x128xf32>
    %cst_188 = arith.constant 1.250000e+00 : f32
    %583 = vector.broadcast %cst_188 : f32 to vector<8x128xf32>
    %584 = arith.mulf %582, %583 : vector<8x128xf32>
    %cst_189 = arith.constant -2.200000e+00 : f32
    %585 = vector.broadcast %cst_189 : f32 to vector<8x128xf32>
    %586 = arith.subf %329, %585 : vector<8x128xf32>
    %587 = arith.mulf %586, %512 : vector<8x128xf32>
    %cst_190 = arith.constant -6.000000e-01 : f32
    %588 = vector.broadcast %cst_190 : f32 to vector<8x128xf32>
    %589 = arith.subf %588, %329 : vector<8x128xf32>
    %590 = arith.mulf %589, %521 : vector<8x128xf32>
    %591 = arith.addf %587, %590 : vector<8x128xf32>
    %cst_191 = arith.constant 0.833333313 : f32
    %592 = vector.broadcast %cst_191 : f32 to vector<8x128xf32>
    %593 = arith.mulf %591, %592 : vector<8x128xf32>
    %cst_192 = arith.constant -1.800000e+00 : f32
    %594 = vector.broadcast %cst_192 : f32 to vector<8x128xf32>
    %595 = arith.subf %329, %594 : vector<8x128xf32>
    %596 = arith.mulf %595, %521 : vector<8x128xf32>
    %cst_193 = arith.constant -2.000000e-01 : f32
    %597 = vector.broadcast %cst_193 : f32 to vector<8x128xf32>
    %598 = arith.subf %597, %329 : vector<8x128xf32>
    %599 = arith.mulf %598, %530 : vector<8x128xf32>
    %600 = arith.addf %596, %599 : vector<8x128xf32>
    %cst_194 = arith.constant 0.833333313 : f32
    %601 = vector.broadcast %cst_194 : f32 to vector<8x128xf32>
    %602 = arith.mulf %600, %601 : vector<8x128xf32>
    %cst_195 = arith.constant -1.400000e+00 : f32
    %603 = vector.broadcast %cst_195 : f32 to vector<8x128xf32>
    %604 = arith.subf %329, %603 : vector<8x128xf32>
    %605 = arith.mulf %604, %530 : vector<8x128xf32>
    %cst_196 = arith.constant 2.000000e-01 : f32
    %606 = vector.broadcast %cst_196 : f32 to vector<8x128xf32>
    %607 = arith.subf %606, %329 : vector<8x128xf32>
    %608 = arith.mulf %607, %539 : vector<8x128xf32>
    %609 = arith.addf %605, %608 : vector<8x128xf32>
    %cst_197 = arith.constant 0.833333313 : f32
    %610 = vector.broadcast %cst_197 : f32 to vector<8x128xf32>
    %611 = arith.mulf %609, %610 : vector<8x128xf32>
    %cst_198 = arith.constant -1.000000e+00 : f32
    %612 = vector.broadcast %cst_198 : f32 to vector<8x128xf32>
    %613 = arith.subf %329, %612 : vector<8x128xf32>
    %614 = arith.mulf %613, %539 : vector<8x128xf32>
    %cst_199 = arith.constant 6.000000e-01 : f32
    %615 = vector.broadcast %cst_199 : f32 to vector<8x128xf32>
    %616 = arith.subf %615, %329 : vector<8x128xf32>
    %617 = arith.mulf %616, %548 : vector<8x128xf32>
    %618 = arith.addf %614, %617 : vector<8x128xf32>
    %cst_200 = arith.constant 0.833333313 : f32
    %619 = vector.broadcast %cst_200 : f32 to vector<8x128xf32>
    %620 = arith.mulf %618, %619 : vector<8x128xf32>
    %cst_201 = arith.constant -6.000000e-01 : f32
    %621 = vector.broadcast %cst_201 : f32 to vector<8x128xf32>
    %622 = arith.subf %329, %621 : vector<8x128xf32>
    %623 = arith.mulf %622, %548 : vector<8x128xf32>
    %cst_202 = arith.constant 1.000000e+00 : f32
    %624 = vector.broadcast %cst_202 : f32 to vector<8x128xf32>
    %625 = arith.subf %624, %329 : vector<8x128xf32>
    %626 = arith.mulf %625, %557 : vector<8x128xf32>
    %627 = arith.addf %623, %626 : vector<8x128xf32>
    %cst_203 = arith.constant 0.833333313 : f32
    %628 = vector.broadcast %cst_203 : f32 to vector<8x128xf32>
    %629 = arith.mulf %627, %628 : vector<8x128xf32>
    %cst_204 = arith.constant -2.000000e-01 : f32
    %630 = vector.broadcast %cst_204 : f32 to vector<8x128xf32>
    %631 = arith.subf %329, %630 : vector<8x128xf32>
    %632 = arith.mulf %631, %557 : vector<8x128xf32>
    %cst_205 = arith.constant 1.400000e+00 : f32
    %633 = vector.broadcast %cst_205 : f32 to vector<8x128xf32>
    %634 = arith.subf %633, %329 : vector<8x128xf32>
    %635 = arith.mulf %634, %566 : vector<8x128xf32>
    %636 = arith.addf %632, %635 : vector<8x128xf32>
    %cst_206 = arith.constant 0.833333313 : f32
    %637 = vector.broadcast %cst_206 : f32 to vector<8x128xf32>
    %638 = arith.mulf %636, %637 : vector<8x128xf32>
    %cst_207 = arith.constant 2.000000e-01 : f32
    %639 = vector.broadcast %cst_207 : f32 to vector<8x128xf32>
    %640 = arith.subf %329, %639 : vector<8x128xf32>
    %641 = arith.mulf %640, %566 : vector<8x128xf32>
    %cst_208 = arith.constant 1.800000e+00 : f32
    %642 = vector.broadcast %cst_208 : f32 to vector<8x128xf32>
    %643 = arith.subf %642, %329 : vector<8x128xf32>
    %644 = arith.mulf %643, %575 : vector<8x128xf32>
    %645 = arith.addf %641, %644 : vector<8x128xf32>
    %cst_209 = arith.constant 0.833333313 : f32
    %646 = vector.broadcast %cst_209 : f32 to vector<8x128xf32>
    %647 = arith.mulf %645, %646 : vector<8x128xf32>
    %cst_210 = arith.constant 6.000000e-01 : f32
    %648 = vector.broadcast %cst_210 : f32 to vector<8x128xf32>
    %649 = arith.subf %329, %648 : vector<8x128xf32>
    %650 = arith.mulf %649, %575 : vector<8x128xf32>
    %cst_211 = arith.constant 2.200000e+00 : f32
    %651 = vector.broadcast %cst_211 : f32 to vector<8x128xf32>
    %652 = arith.subf %651, %329 : vector<8x128xf32>
    %653 = arith.mulf %652, %584 : vector<8x128xf32>
    %654 = arith.addf %650, %653 : vector<8x128xf32>
    %cst_212 = arith.constant 0.833333313 : f32
    %655 = vector.broadcast %cst_212 : f32 to vector<8x128xf32>
    %656 = arith.mulf %654, %655 : vector<8x128xf32>
    %657 = tpu.concatenate %336, %593, %602, %611, %620, %629, %638, %647, %656 in 1 : vector<8x128xf32>, vector<8x128xf32>, vector<8x128xf32>, vector<8x128xf32>, vector<8x128xf32>, vector<8x128xf32>, vector<8x128xf32>, vector<8x128xf32>, vector<8x128xf32> -> vector<8x1152xf32>
    %cst_213 = arith.constant dense<0.000000e+00> : vector<8x128xf32>
    %658 = tpu.matmul %657, %330, %cst_213 {dimension_numbers = #tpu.dot_dimension_numbers<[1], [0], [0], [1], [0, 0, 1, 1], [], []>} : vector<8x1152xf32>, vector<1152x128xf32>, vector<8x128xf32> -> vector<8x128xf32>
    %c0_214 = arith.constant 0 : index
    %c0_215 = arith.constant 0 : index
    %659 = vector.load %arg4[%c0_214, %c0_215] : memref<8x128xf32, #tpu.memory_space<vmem>>, vector<8x128xf32>
    tpu.vector_store %arg4[%c0_214, %c0_215], %658 {strides = array<i32>} : memref<8x128xf32, #tpu.memory_space<vmem>>, vector<8x128xf32>,
    return
  }
  func.func @transform_0(%arg0: i32) -> (i32, i32) {
    %c0_i32 = arith.constant 0 : i32
    %c0_i32_0 = arith.constant 0 : i32
    return %arg0, %c0_i32 : i32, i32
  }
  func.func @transform_1(%arg0: i32) -> (i32, i32) {
    %c0_i32 = arith.constant 0 : i32
    %c0_i32_0 = arith.constant 0 : i32
    %c0_i32_1 = arith.constant 0 : i32
    return %c0_i32, %c0_i32_0 : i32, i32
  }
  func.func @transform_2(%arg0: i32) -> (i32, i32) {
    %c0_i32 = arith.constant 0 : i32
    %c0_i32_0 = arith.constant 0 : i32
    %c0_i32_1 = arith.constant 0 : i32
    return %c0_i32, %c0_i32_0 : i32, i32
  }
  func.func @transform_3(%arg0: i32) -> (i32, i32) {
    %c0_i32 = arith.constant 0 : i32
    %c0_i32_0 = arith.constant 0 : i32
    return %arg0, %c0_i32 : i32, i32
  }
}

</mosaic_0001>

<llo_original>
// kernel: kan_forward.1
$region0: #{kan_forward.1}
  #allocation0 [shape = 'u32[]', space=smem, size = 0x4, offset = 0x4, fixed_abs, tag = 'smem constant byte address 0x4 - core index']
  #allocation1 [shape = 'u32[144,128]{1,0:T(1,128)}', space=vmem, size = 0x12000, scoped, tag = 'internal scratch']
  %s0 = inlined_call_operand.vmem [shape: f32[8,128], index: 0, kind: input, shape index: {}]
  %s1 = inlined_call_operand.hbm [shape: f32[1152,128], index: 1, kind: input, shape index: {}]
  %s2 = inlined_call_operand.hbm [shape: f32[1152,128], index: 2, kind: input, shape index: {}]
  %s3 = inlined_call_operand.hbm [shape: f32[8,128], index: 3, kind: output, shape index: {}]
  %s4 = sld [smem:[#allocation0]]
  $region30: #{kan_forward.1} parent=0
    _
  %s6 = ssub.s32 1, %s4
  %s7 = scalar_select 0, %s6, %s4
  $region1: #{kan_forward.1} parent=0
    #allocation2 [shape = 'u8[589824]{0}', space=vmem, size = 0x90000, scoped, tag = 'input window, operand 1, single buffered']
    #allocation3 [shape = 's32[1]{0}', space=sflag, size = 0x4, scoped, tag = 'scoped memory for kan_forward.1']
    #allocation4 [shape = 's32[1]{0}', space=sflag, size = 0x4, scoped, tag = 'scoped memory for kan_forward.1']
    #allocation5 [shape = 'u8[589824]{0}', space=vmem, size = 0x90000, scoped, tag = 'input window, operand 2, single buffered']
    #allocation6 [shape = 's32[1]{0}', space=sflag, size = 0x4, scoped, tag = 'scoped memory for kan_forward.1']
    #allocation7 [shape = 'u8[4096]{0}', space=vmem, size = 0x1000, scoped, tag = 'output window, operand 0, single buffered']
    %8 = vsyncpa [#allocation3], 0
    %9 = vsyncpa [#allocation6], 0
    %10 = vsyncpa [#allocation4], 0
    // Predicated region
    $region2: #{kan_forward.1} parent=1 // pred_check
      _
    $region3: #{kan_forward.1} parent=1 // pred_check_branch
      %12 = sbr.rel (0) target = $region5
    $region4: #{kan_forward.1} parent=1 // pred_region
      _
    $region5: #{kan_forward.1} parent=1 // pred_fallthru
      _
    // Predicated region
    $region6: #{kan_forward.1} parent=1 // pred_check
      _
    $region7: #{kan_forward.1} parent=1 // pred_check_branch
      %14 = sbr.rel (0) target = $region9
    $region8: #{kan_forward.1} parent=1 // pred_region
      %s16 = ssub.s32 18432, 18432
      %17 = vsyncadd [#allocation3], %s16
      %s18 = sshll.u32 [#allocation2], 4
      %s19 = int_to_ptr.vmem [resolvable:$true] %s18
      %24 = dma.hbm_to_vmem [thread:$0]  %s1, 18432, %s19, [#allocation3], 128, 128, 8
    $region9: #{kan_forward.1} parent=1 // pred_fallthru
      _
    // Predicated region
    $region10: #{kan_forward.1} parent=1 // pred_check
      _
    $region11: #{kan_forward.1} parent=1 // pred_check_branch
      %26 = sbr.rel (0) target = $region13
    $region12: #{kan_forward.1} parent=1 // pred_region
      %s28 = ssub.s32 18432, 18432
      %29 = vsyncadd [#allocation6], %s28
      %s30 = sshll.u32 [#allocation5], 4
      %s31 = int_to_ptr.vmem [resolvable:$true] %s30
      %36 = dma.hbm_to_vmem [thread:$0]  %s2, 18432, %s31, [#allocation6], 128, 128, 8
    $region13: #{kan_forward.1} parent=1 // pred_fallthru
      _
    // Predicated region
    $region14: #{kan_forward.1} parent=1 // pred_check
      _
    $region15: #{kan_forward.1} parent=1 // pred_check_branch
      %38 = sbr.rel (0) target = $region17
    $region16: #{kan_forward.1} parent=1 // pred_region
      %39 = dma.done [#allocation3], 18432
    $region17: #{kan_forward.1} parent=1 // pred_fallthru
      _
    // Predicated region
    $region18: #{kan_forward.1} parent=1 // pred_check
      _
    $region19: #{kan_forward.1} parent=1 // pred_check_branch
      %41 = sbr.rel (0) target = $region21
    $region20: #{kan_forward.1} parent=1 // pred_region
      %42 = dma.done [#allocation6], 18432
    $region21: #{kan_forward.1} parent=1 // pred_fallthru
      _
    %v43 = vld [vmem:[%s0] sm:$0xff]
    %v44 = vld [vmem:[#allocation2] sm:$0xff]
    %v45 = vld [vmem:[#allocation2 + $0x8] sm:$0xff]
    %v46 = vld [vmem:[#allocation2 + $0x10] sm:$0xff]
    %v47 = vld [vmem:[#allocation2 + $0x18] sm:$0xff]
    %v48 = vld [vmem:[#allocation2 + $0x20] sm:$0xff]
    %v49 = vld [vmem:[#allocation2 + $0x28] sm:$0xff]
    %v50 = vld [vmem:[#allocation2 + $0x30] sm:$0xff]
    %v51 = vld [vmem:[#allocation2 + $0x38] sm:$0xff]
    %v52 = vld [vmem:[#allocation2 + $0x40] sm:$0xff]
    %v53 = vld [vmem:[#allocation2 + $0x48] sm:$0xff]
    %v54 = vld [vmem:[#allocation2 + $0x50] sm:$0xff]
    %v55 = vld [vmem:[#allocation2 + $0x58] sm:$0xff]
    %v56 = vld [vmem:[#allocation2 + $0x60] sm:$0xff]
    %v57 = vld [vmem:[#allocation2 + $0x68] sm:$0xff]
    %v58 = vld [vmem:[#allocation2 + $0x70] sm:$0xff]
    %v59 = vld [vmem:[#allocation2 + $0x78] sm:$0xff]
    %v60 = vld [vmem:[#allocation2 + $0x80] sm:$0xff]
    %v61 = vld [vmem:[#allocation2 + $0x88] sm:$0xff]
    %v62 = vld [vmem:[#allocation2 + $0x90] sm:$0xff]
    %v63 = vld [vmem:[#allocation2 + $0x98] sm:$0xff]
    %v64 = vld [vmem:[#allocation2 + $0xa0] sm:$0xff]
    %v65 = vld [vmem:[#allocation2 + $0xa8] sm:$0xff]
    %v66 = vld [vmem:[#allocation2 + $0xb0] sm:$0xff]
    %v67 = vld [vmem:[#allocation2 + $0xb8] sm:$0xff]
    %v68 = vld [vmem:[#allocation2 + $0xc0] sm:$0xff]
    %v69 = vld [vmem:[#allocation2 + $0xc8] sm:$0xff]
    %v70 = vld [vmem:[#allocation2 + $0xd0] sm:$0xff]
    %v71 = vld [vmem:[#allocation2 + $0xd8] sm:$0xff]
    %v72 = vld [vmem:[#allocation2 + $0xe0] sm:$0xff]
    %v73 = vld [vmem:[#allocation2 + $0xe8] sm:$0xff]
    %v74 = vld [vmem:[#allocation2 + $0xf0] sm:$0xff]
    %v75 = vld [vmem:[#allocation2 + $0xf8] sm:$0xff]
    %v76 = vld [vmem:[#allocation2 + $0x100] sm:$0xff]
    %v77 = vld [vmem:[#allocation2 + $0x108] sm:$0xff]
    %v78 = vld [vmem:[#allocation2 + $0x110] sm:$0xff]
    %v79 = vld [vmem:[#allocation2 + $0x118] sm:$0xff]
    %v80 = vld [vmem:[#allocation2 + $0x120] sm:$0xff]
    %v81 = vld [vmem:[#allocation2 + $0x128] sm:$0xff]
    %v82 = vld [vmem:[#allocation2 + $0x130] sm:$0xff]
    %v83 = vld [vmem:[#allocation2 + $0x138] sm:$0xff]
    %v84 = vld [vmem:[#allocation2 + $0x140] sm:$0xff]
    %v85 = vld [vmem:[#allocation2 + $0x148] sm:$0xff]
    %v86 = vld [vmem:[#allocation2 + $0x150] sm:$0xff]
    %v87 = vld [vmem:[#allocation2 + $0x158] sm:$0xff]
    %v88 = vld [vmem:[#allocation2 + $0x160] sm:$0xff]
    %v89 = vld [vmem:[#allocation2 + $0x168] sm:$0xff]
    %v90 = vld [vmem:[#allocation2 + $0x170] sm:$0xff]
    %v91 = vld [vmem:[#allocation2 + $0x178] sm:$0xff]
    %v92 = vld [vmem:[#allocation2 + $0x180] sm:$0xff]
    %v93 = vld [vmem:[#allocation2 + $0x188] sm:$0xff]
    %v94 = vld [vmem:[#allocation2 + $0x190] sm:$0xff]
    %v95 = vld [vmem:[#allocation2 + $0x198] sm:$0xff]
    %v96 = vld [vmem:[#allocation2 + $0x1a0] sm:$0xff]
    %v97 = vld [vmem:[#allocation2 + $0x1a8] sm:$0xff]
    %v98 = vld [vmem:[#allocation2 + $0x1b0] sm:$0xff]
    %v99 = vld [vmem:[#allocation2 + $0x1b8] sm:$0xff]
    %v100 = vld [vmem:[#allocation2 + $0x1c0] sm:$0xff]
    %v101 = vld [vmem:[#allocation2 + $0x1c8] sm:$0xff]
    %v102 = vld [vmem:[#allocation2 + $0x1d0] sm:$0xff]
    %v103 = vld [vmem:[#allocation2 + $0x1d8] sm:$0xff]
    %v104 = vld [vmem:[#allocation2 + $0x1e0] sm:$0xff]
    %v105 = vld [vmem:[#allocation2 + $0x1e8] sm:$0xff]
    %v106 = vld [vmem:[#allocation2 + $0x1f0] sm:$0xff]
    %v107 = vld [vmem:[#allocation2 + $0x1f8] sm:$0xff]
    %v108 = vld [vmem:[#allocation2 + $0x200] sm:$0xff]
    %v109 = vld [vmem:[#allocation2 + $0x208] sm:$0xff]
    %v110 = vld [vmem:[#allocation2 + $0x210] sm:$0xff]
    %v111 = vld [vmem:[#allocation2 + $0x218] sm:$0xff]
    %v112 = vld [vmem:[#allocation2 + $0x220] sm:$0xff]
    %v113 = vld [vmem:[#allocation2 + $0x228] sm:$0xff]
    %v114 = vld [vmem:[#allocation2 + $0x230] sm:$0xff]
    %v115 = vld [vmem:[#allocation2 + $0x238] sm:$0xff]
    %v116 = vld [vmem:[#allocation2 + $0x240] sm:$0xff]
    %v117 = vld [vmem:[#allocation2 + $0x248] sm:$0xff]
    %v118 = vld [vmem:[#allocation2 + $0x250] sm:$0xff]
    %v119 = vld [vmem:[#allocation2 + $0x258] sm:$0xff]
    %v120 = vld [vmem:[#allocation2 + $0x260] sm:$0xff]
    %v121 = vld [vmem:[#allocation2 + $0x268] sm:$0xff]
    %v122 = vld [vmem:[#allocation2 + $0x270] sm:$0xff]
    %v123 = vld [vmem:[#allocation2 + $0x278] sm:$0xff]
    %v124 = vld [vmem:[#allocation2 + $0x280] sm:$0xff]
    %v125 = vld [vmem:[#allocation2 + $0x288] sm:$0xff]
    %v126 = vld [vmem:[#allocation2 + $0x290] sm:$0xff]
    %v127 = vld [vmem:[#allocation2 + $0x298] sm:$0xff]
    %v128 = vld [vmem:[#allocation2 + $0x2a0] sm:$0xff]
    %v129 = vld [vmem:[#allocation2 + $0x2a8] sm:$0xff]
    %v130 = vld [vmem:[#allocation2 + $0x2b0] sm:$0xff]
    %v131 = vld [vmem:[#allocation2 + $0x2b8] sm:$0xff]
    %v132 = vld [vmem:[#allocation2 + $0x2c0] sm:$0xff]
    %v133 = vld [vmem:[#allocation2 + $0x2c8] sm:$0xff]
    %v134 = vld [vmem:[#allocation2 + $0x2d0] sm:$0xff]
    %v135 = vld [vmem:[#allocation2 + $0x2d8] sm:$0xff]
    %v136 = vld [vmem:[#allocation2 + $0x2e0] sm:$0xff]
    %v137 = vld [vmem:[#allocation2 + $0x2e8] sm:$0xff]
    %v138 = vld [vmem:[#allocation2 + $0x2f0] sm:$0xff]
    %v139 = vld [vmem:[#allocation2 + $0x2f8] sm:$0xff]
    %v140 = vld [vmem:[#allocation2 + $0x300] sm:$0xff]
    %v141 = vld [vmem:[#allocation2 + $0x308] sm:$0xff]
    %v142 = vld [vmem:[#allocation2 + $0x310] sm:$0xff]
    %v143 = vld [vmem:[#allocation2 + $0x318] sm:$0xff]
    %v144 = vld [vmem:[#allocation2 + $0x320] sm:$0xff]
    %v145 = vld [vmem:[#allocation2 + $0x328] sm:$0xff]
    %v146 = vld [vmem:[#allocation2 + $0x330] sm:$0xff]
    %v147 = vld [vmem:[#allocation2 + $0x338] sm:$0xff]
    %v148 = vld [vmem:[#allocation2 + $0x340] sm:$0xff]
    %v149 = vld [vmem:[#allocation2 + $0x348] sm:$0xff]
    %v150 = vld [vmem:[#allocation2 + $0x350] sm:$0xff]
    %v151 = vld [vmem:[#allocation2 + $0x358] sm:$0xff]
    %v152 = vld [vmem:[#allocation2 + $0x360] sm:$0xff]
    %v153 = vld [vmem:[#allocation2 + $0x368] sm:$0xff]
    %v154 = vld [vmem:[#allocation2 + $0x370] sm:$0xff]
    %v155 = vld [vmem:[#allocation2 + $0x378] sm:$0xff]
    %v156 = vld [vmem:[#allocation2 + $0x380] sm:$0xff]
    %v157 = vld [vmem:[#allocation2 + $0x388] sm:$0xff]
    %v158 = vld [vmem:[#allocation2 + $0x390] sm:$0xff]
    %v159 = vld [vmem:[#allocation2 + $0x398] sm:$0xff]
    %v160 = vld [vmem:[#allocation2 + $0x3a0] sm:$0xff]
    %v161 = vld [vmem:[#allocation2 + $0x3a8] sm:$0xff]
    %v162 = vld [vmem:[#allocation2 + $0x3b0] sm:$0xff]
    %v163 = vld [vmem:[#allocation2 + $0x3b8] sm:$0xff]
    %v164 = vld [vmem:[#allocation2 + $0x3c0] sm:$0xff]
    %v165 = vld [vmem:[#allocation2 + $0x3c8] sm:$0xff]
    %v166 = vld [vmem:[#allocation2 + $0x3d0] sm:$0xff]
    %v167 = vld [vmem:[#allocation2 + $0x3d8] sm:$0xff]
    %v168 = vld [vmem:[#allocation2 + $0x3e0] sm:$0xff]
    %v169 = vld [vmem:[#allocation2 + $0x3e8] sm:$0xff]
    %v170 = vld [vmem:[#allocation2 + $0x3f0] sm:$0xff]
    %v171 = vld [vmem:[#allocation2 + $0x3f8] sm:$0xff]
    %v172 = vld [vmem:[#allocation2 + $0x400] sm:$0xff]
    %v173 = vld [vmem:[#allocation2 + $0x408] sm:$0xff]
    %v174 = vld [vmem:[#allocation2 + $0x410] sm:$0xff]
    %v175 = vld [vmem:[#allocation2 + $0x418] sm:$0xff]
    %v176 = vld [vmem:[#allocation2 + $0x420] sm:$0xff]
    %v177 = vld [vmem:[#allocation2 + $0x428] sm:$0xff]
    %v178 = vld [vmem:[#allocation2 + $0x430] sm:$0xff]
    %v179 = vld [vmem:[#allocation2 + $0x438] sm:$0xff]
    %v180 = vld [vmem:[#allocation2 + $0x440] sm:$0xff]
    %v181 = vld [vmem:[#allocation2 + $0x448] sm:$0xff]
    %v182 = vld [vmem:[#allocation2 + $0x450] sm:$0xff]
    %v183 = vld [vmem:[#allocation2 + $0x458] sm:$0xff]
    %v184 = vld [vmem:[#allocation2 + $0x460] sm:$0xff]
    %v185 = vld [vmem:[#allocation2 + $0x468] sm:$0xff]
    %v186 = vld [vmem:[#allocation2 + $0x470] sm:$0xff]
    %v187 = vld [vmem:[#allocation2 + $0x478] sm:$0xff]
    %v188 = vxor.u32 %v43, 2147483648
    %v189 = vmul.f32 %v188, 1.442695
    %v190 = vpow.pop %v189
    %v191 = vadd.f32 %v190, 1.0
    %v192 = vrcp.pop %v191
    %v193 = vmul.f32 1.0, %v192
    %v194 = vmul.f32 %v43, %v193
    %vm195 = vcmp.ge.f32.partialorder %v43, -2.2
    %vm196 = vcmp.lt.f32.partialorder %v43, -1.8
    %vm197 = vmand %vm195, %vm196
    %v198 = vsel %vm197, 1, 0
    %v199 = vcvt.s32.f32 %v198
    %vm200 = vcmp.ge.f32.partialorder %v43, -1.8
    %vm201 = vcmp.lt.f32.partialorder %v43, -1.4
    %vm202 = vmand %vm200, %vm201
    %v203 = vsel %vm202, 1, 0
    %v204 = vcvt.s32.f32 %v203
    %vm205 = vcmp.ge.f32.partialorder %v43, -1.4
    %vm206 = vcmp.lt.f32.partialorder %v43, -1.0
    %vm207 = vmand %vm205, %vm206
    %v208 = vsel %vm207, 1, 0
    %v209 = vcvt.s32.f32 %v208
    %vm210 = vcmp.ge.f32.partialorder %v43, -1.0
    %vm211 = vcmp.lt.f32.partialorder %v43, -0.6
    %vm212 = vmand %vm210, %vm211
    %v213 = vsel %vm212, 1, 0
    %v214 = vcvt.s32.f32 %v213
    %vm215 = vcmp.ge.f32.partialorder %v43, -0.6
    %vm216 = vcmp.lt.f32.partialorder %v43, -0.2
    %vm217 = vmand %vm215, %vm216
    %v218 = vsel %vm217, 1, 0
    %v219 = vcvt.s32.f32 %v218
    %vm220 = vcmp.ge.f32.partialorder %v43, -0.2
    %vm221 = vcmp.lt.f32.partialorder %v43, 0.2
    %vm222 = vmand %vm220, %vm221
    %v223 = vsel %vm222, 1, 0
    %v224 = vcvt.s32.f32 %v223
    %vm225 = vcmp.ge.f32.partialorder %v43, 0.2
    %vm226 = vcmp.lt.f32.partialorder %v43, 0.6
    %vm227 = vmand %vm225, %vm226
    %v228 = vsel %vm227, 1, 0
    %v229 = vcvt.s32.f32 %v228
    %vm230 = vcmp.ge.f32.partialorder %v43, 0.6
    %vm231 = vcmp.lt.f32.partialorder %v43, 1.0
    %vm232 = vmand %vm230, %vm231
    %v233 = vsel %vm232, 1, 0
    %v234 = vcvt.s32.f32 %v233
    %vm235 = vcmp.ge.f32.partialorder %v43, 1.0
    %vm236 = vcmp.lt.f32.partialorder %v43, 1.4
    %vm237 = vmand %vm235, %vm236
    %v238 = vsel %vm237, 1, 0
    %v239 = vcvt.s32.f32 %v238
    %vm240 = vcmp.ge.f32.partialorder %v43, 1.4
    %vm241 = vcmp.lt.f32.partialorder %v43, 1.8
    %vm242 = vmand %vm240, %vm241
    %v243 = vsel %vm242, 1, 0
    %v244 = vcvt.s32.f32 %v243
    %vm245 = vcmp.ge.f32.partialorder %v43, 1.8
    %vm246 = vcmp.lt.f32.partialorder %v43, 2.2
    %vm247 = vmand %vm245, %vm246
    %v248 = vsel %vm247, 1, 0
    %v249 = vcvt.s32.f32 %v248
    %v250 = vsub.f32 %v43, -2.2
    %v251 = vmul.f32 %v250, %v199
    %v252 = vsub.f32 -1.4, %v43
    %v253 = vmul.f32 %v252, %v204
    %v254 = vadd.f32 %v251, %v253
    %v255 = vmul.f32 %v254, 2.5
    %v256 = vsub.f32 %v43, -1.8
    %v257 = vmul.f32 %v256, %v204
    %v258 = vsub.f32 -1.0, %v43
    %v259 = vmul.f32 %v258, %v209
    %v260 = vadd.f32 %v257, %v259
    %v261 = vmul.f32 %v260, 2.5
    %v262 = vsub.f32 %v43, -1.4
    %v263 = vmul.f32 %v262, %v209
    %v264 = vsub.f32 -0.6, %v43
    %v265 = vmul.f32 %v264, %v214
    %v266 = vadd.f32 %v263, %v265
    %v267 = vmul.f32 %v266, 2.5
    %v268 = vsub.f32 %v43, -1.0
    %v269 = vmul.f32 %v268, %v214
    %v270 = vsub.f32 -0.2, %v43
    %v271 = vmul.f32 %v270, %v219
    %v272 = vadd.f32 %v269, %v271
    %v273 = vmul.f32 %v272, 2.5
    %v274 = vsub.f32 %v43, -0.6
    %v275 = vmul.f32 %v274, %v219
    %v276 = vsub.f32 0.2, %v43
    %v277 = vmul.f32 %v276, %v224
    %v278 = vadd.f32 %v275, %v277
    %v279 = vmul.f32 %v278, 2.5
    %v280 = vsub.f32 %v43, -0.2
    %v281 = vmul.f32 %v280, %v224
    %v282 = vsub.f32 0.6, %v43
    %v283 = vmul.f32 %v282, %v229
    %v284 = vadd.f32 %v281, %v283
    %v285 = vmul.f32 %v284, 2.5
    %v286 = vsub.f32 %v43, 0.2
    %v287 = vmul.f32 %v286, %v229
    %v288 = vsub.f32 1.0, %v43
    %v289 = vmul.f32 %v288, %v234
    %v290 = vadd.f32 %v287, %v289
    %v291 = vmul.f32 %v290, 2.5
    %v292 = vsub.f32 %v43, 0.6
    %v293 = vmul.f32 %v292, %v234
    %v294 = vsub.f32 1.4, %v43
    %v295 = vmul.f32 %v294, %v239
    %v296 = vadd.f32 %v293, %v295
    %v297 = vmul.f32 %v296, 2.5
    %v298 = vsub.f32 %v43, 1.0
    %v299 = vmul.f32 %v298, %v239
    %v300 = vsub.f32 1.8, %v43
    %v301 = vmul.f32 %v300, %v244
    %v302 = vadd.f32 %v299, %v301
    %v303 = vmul.f32 %v302, 2.5
    %v304 = vsub.f32 %v43, 1.4
    %v305 = vmul.f32 %v304, %v244
    %v306 = vsub.f32 2.2, %v43
    %v307 = vmul.f32 %v306, %v249
    %v308 = vadd.f32 %v305, %v307
    %v309 = vmul.f32 %v308, 2.5
    %v310 = vmul.f32 %v250, %v255
    %v311 = vmul.f32 %v258, %v261
    %v312 = vadd.f32 %v310, %v311
    %v313 = vmul.f32 %v312, 1.25
    %v314 = vmul.f32 %v256, %v261
    %v315 = vmul.f32 %v264, %v267
    %v316 = vadd.f32 %v314, %v315
    %v317 = vmul.f32 %v316, 1.25
    %v318 = vmul.f32 %v262, %v267
    %v319 = vmul.f32 %v270, %v273
    %v320 = vadd.f32 %v318, %v319
    %v321 = vmul.f32 %v320, 1.25
    %v322 = vmul.f32 %v268, %v273
    %v323 = vmul.f32 %v276, %v279
    %v324 = vadd.f32 %v322, %v323
    %v325 = vmul.f32 %v324, 1.25
    %v326 = vmul.f32 %v274, %v279
    %v327 = vmul.f32 %v282, %v285
    %v328 = vadd.f32 %v326, %v327
    %v329 = vmul.f32 %v328, 1.25
    %v330 = vmul.f32 %v280, %v285
    %v331 = vmul.f32 %v288, %v291
    %v332 = vadd.f32 %v330, %v331
    %v333 = vmul.f32 %v332, 1.25
    %v334 = vmul.f32 %v286, %v291
    %v335 = vmul.f32 %v294, %v297
    %v336 = vadd.f32 %v334, %v335
    %v337 = vmul.f32 %v336, 1.25
    %v338 = vmul.f32 %v292, %v297
    %v339 = vmul.f32 %v300, %v303
    %v340 = vadd.f32 %v338, %v339
    %v341 = vmul.f32 %v340, 1.25
    %v342 = vmul.f32 %v298, %v303
    %v343 = vmul.f32 %v306, %v309
    %v344 = vadd.f32 %v342, %v343
    %v345 = vmul.f32 %v344, 1.25
    %v346 = vmul.f32 %v250, %v313
    %v347 = vmul.f32 %v264, %v317
    %v348 = vadd.f32 %v346, %v347
    %v349 = vmul.f32 %v348, 0.8333333
    %v350 = vmul.f32 %v256, %v317
    %v351 = vmul.f32 %v270, %v321
    %v352 = vadd.f32 %v350, %v351
    %v353 = vmul.f32 %v352, 0.8333333
    %v354 = vmul.f32 %v262, %v321
    %v355 = vmul.f32 %v276, %v325
    %v356 = vadd.f32 %v354, %v355
    %v357 = vmul.f32 %v356, 0.8333333
    %v358 = vmul.f32 %v268, %v325
    %v359 = vmul.f32 %v282, %v329
    %v360 = vadd.f32 %v358, %v359
    %v361 = vmul.f32 %v360, 0.8333333
    %v362 = vmul.f32 %v274, %v329
    %v363 = vmul.f32 %v288, %v333
    %v364 = vadd.f32 %v362, %v363
    %v365 = vmul.f32 %v364, 0.8333333
    %v366 = vmul.f32 %v280, %v333
    %v367 = vmul.f32 %v294, %v337
    %v368 = vadd.f32 %v366, %v367
    %v369 = vmul.f32 %v368, 0.8333333
    %v370 = vmul.f32 %v286, %v337
    %v371 = vmul.f32 %v300, %v341
    %v372 = vadd.f32 %v370, %v371
    %v373 = vmul.f32 %v372, 0.8333333
    %v374 = vmul.f32 %v292, %v341
    %v375 = vmul.f32 %v306, %v345
    %v376 = vadd.f32 %v374, %v375
    %v377 = vmul.f32 %v376, 0.8333333
    %378 = vmatprep.subr.mxu0 0.0
    %379 = vmatpush1.msra.mxu0 %v44
    %380 = vmatprep.subr.mxu0 0.0
    %381 = vmatpush1.msra.mxu0 %v45
    %382 = vmatprep.subr.mxu0 0.0
    %383 = vmatpush1.msra.mxu0 %v46
    %384 = vmatprep.subr.mxu0 0.0
    %385 = vmatpush1.msra.mxu0 %v47
    %386 = vmatprep.subr.mxu0 0.0
    %387 = vmatpush1.msra.mxu0 %v48
    %388 = vmatprep.subr.mxu0 0.0
    %389 = vmatpush1.msra.mxu0 %v49
    %390 = vmatprep.subr.mxu0 0.0
    %391 = vmatpush1.msra.mxu0 %v50
    %392 = vmatprep.subr.mxu0 0.0
    %393 = vmatpush1.msra.mxu0 %v51
    %394 = vmatprep.subr.mxu0 0.0
    %395 = vmatpush1.msra.mxu0 %v52
    %396 = vmatprep.subr.mxu0 0.0
    %397 = vmatpush1.msra.mxu0 %v53
    %398 = vmatprep.subr.mxu0 0.0
    %399 = vmatpush1.msra.mxu0 %v54
    %400 = vmatprep.subr.mxu0 0.0
    %401 = vmatpush1.msra.mxu0 %v55
    %402 = vmatprep.subr.mxu0 0.0
    %403 = vmatpush1.msra.mxu0 %v56
    %404 = vmatprep.subr.mxu0 0.0
    %405 = vmatpush1.msra.mxu0 %v57
    %406 = vmatprep.subr.mxu0 0.0
    %407 = vmatpush1.msra.mxu0 %v58
    %408 = vmatprep.subr.mxu0 0.0
    %409 = vmatpush1.msra.mxu0 %v59
    %410 = vmatprep.subr.mxu0 0.0
    %411 = vmatpush1.msra.mxu0 %v60
    %412 = vmatprep.subr.mxu0 0.0
    %413 = vmatpush1.msra.mxu0 %v61
    %414 = vmatprep.subr.mxu0 0.0
    %415 = vmatpush1.msra.mxu0 %v62
    %416 = vmatprep.subr.mxu0 0.0
    %417 = vmatpush1.msra.mxu0 %v63
    %418 = vmatprep.subr.mxu0 0.0
    %419 = vmatpush1.msra.mxu0 %v64
    %420 = vmatprep.subr.mxu0 0.0
    %421 = vmatpush1.msra.mxu0 %v65
    %422 = vmatprep.subr.mxu0 0.0
    %423 = vmatpush1.msra.mxu0 %v66
    %424 = vmatprep.subr.mxu0 0.0
    %425 = vmatpush1.msra.mxu0 %v67
    %426 = vmatprep.subr.mxu0 0.0
    %427 = vmatpush1.msra.mxu0 %v68
    %428 = vmatprep.subr.mxu0 0.0
    %429 = vmatpush1.msra.mxu0 %v69
    %430 = vmatprep.subr.mxu0 0.0
    %431 = vmatpush1.msra.mxu0 %v70
    %432 = vmatprep.subr.mxu0 0.0
    %433 = vmatpush1.msra.mxu0 %v71
    %434 = vmatprep.subr.mxu0 0.0
    %435 = vmatpush1.msra.mxu0 %v72
    %436 = vmatprep.subr.mxu0 0.0
    %437 = vmatpush1.msra.mxu0 %v73
    %438 = vmatprep.subr.mxu0 0.0
    %439 = vmatpush1.msra.mxu0 %v74
    %440 = vmatprep.subr.mxu0 0.0
    %441 = vmatpush1.msra.mxu0 %v75
    %442 = vmatprep.mubr.f32.mxu0 %v349
    %443 = vmatmul.mubr.f32.gmra.mrb[0].mxu0 %v194
    %v444 = vpop.f32.mrb[0].mxu0
    %v445 = vadd.f32 0.0, %v444
    %v446 = vpop.f32.mrb[0].mxu0
    %447 = vdwg.mxu0
    %448 = vmatprep.subr.mxu0 0.0
    %449 = vmatpush1.msra.mxu0 %v76
    %450 = vmatprep.subr.mxu0 0.0
    %451 = vmatpush1.msra.mxu0 %v77
    %452 = vmatprep.subr.mxu0 0.0
    %453 = vmatpush1.msra.mxu0 %v78
    %454 = vmatprep.subr.mxu0 0.0
    %455 = vmatpush1.msra.mxu0 %v79
    %456 = vmatprep.subr.mxu0 0.0
    %457 = vmatpush1.msra.mxu0 %v80
    %458 = vmatprep.subr.mxu0 0.0
    %459 = vmatpush1.msra.mxu0 %v81
    %460 = vmatprep.subr.mxu0 0.0
    %461 = vmatpush1.msra.mxu0 %v82
    %462 = vmatprep.subr.mxu0 0.0
    %463 = vmatpush1.msra.mxu0 %v83
    %464 = vmatprep.subr.mxu0 0.0
    %465 = vmatpush1.msra.mxu0 %v84
    %466 = vmatprep.subr.mxu0 0.0
    %467 = vmatpush1.msra.mxu0 %v85
    %468 = vmatprep.subr.mxu0 0.0
    %469 = vmatpush1.msra.mxu0 %v86
    %470 = vmatprep.subr.mxu0 0.0
    %471 = vmatpush1.msra.mxu0 %v87
    %472 = vmatprep.subr.mxu0 0.0
    %473 = vmatpush1.msra.mxu0 %v88
    %474 = vmatprep.subr.mxu0 0.0
    %475 = vmatpush1.msra.mxu0 %v89
    %476 = vmatprep.subr.mxu0 0.0
    %477 = vmatpush1.msra.mxu0 %v90
    %478 = vmatprep.subr.mxu0 0.0
    %479 = vmatpush1.msra.mxu0 %v91
    %480 = vmatprep.subr.mxu0 0.0
    %481 = vmatpush1.msra.mxu0 %v92
    %482 = vmatprep.subr.mxu0 0.0
    %483 = vmatpush1.msra.mxu0 %v93
    %484 = vmatprep.subr.mxu0 0.0
    %485 = vmatpush1.msra.mxu0 %v94
    %486 = vmatprep.subr.mxu0 0.0
    %487 = vmatpush1.msra.mxu0 %v95
    %488 = vmatprep.subr.mxu0 0.0
    %489 = vmatpush1.msra.mxu0 %v96
    %490 = vmatprep.subr.mxu0 0.0
    %491 = vmatpush1.msra.mxu0 %v97
    %492 = vmatprep.subr.mxu0 0.0
    %493 = vmatpush1.msra.mxu0 %v98
    %494 = vmatprep.subr.mxu0 0.0
    %495 = vmatpush1.msra.mxu0 %v99
    %496 = vmatprep.subr.mxu0 0.0
    %497 = vmatpush1.msra.mxu0 %v100
    %498 = vmatprep.subr.mxu0 0.0
    %499 = vmatpush1.msra.mxu0 %v101
    %500 = vmatprep.subr.mxu0 0.0
    %501 = vmatpush1.msra.mxu0 %v102
    %502 = vmatprep.subr.mxu0 0.0
    %503 = vmatpush1.msra.mxu0 %v103
    %504 = vmatprep.subr.mxu0 0.0
    %505 = vmatpush1.msra.mxu0 %v104
    %506 = vmatprep.subr.mxu0 0.0
    %507 = vmatpush1.msra.mxu0 %v105
    %508 = vmatprep.subr.mxu0 0.0
    %509 = vmatpush1.msra.mxu0 %v106
    %510 = vmatprep.subr.mxu0 0.0
    %511 = vmatpush1.msra.mxu0 %v107
    %512 = vmatprep.mubr.f32.mxu0 %v357
    %513 = vmatmul.mubr.f32.gmra.mrb[0].mxu0 %v353
    %v514 = vpop.f32.mrb[0].mxu0
    %v515 = vadd.f32 %v445, %v514
    %v516 = vpop.f32.mrb[0].mxu0
    %517 = vdwg.mxu0
    %518 = vmatprep.subr.mxu0 0.0
    %519 = vmatpush1.msra.mxu0 %v108
    %520 = vmatprep.subr.mxu0 0.0
    %521 = vmatpush1.msra.mxu0 %v109
    %522 = vmatprep.subr.mxu0 0.0
    %523 = vmatpush1.msra.mxu0 %v110
    %524 = vmatprep.subr.mxu0 0.0
    %525 = vmatpush1.msra.mxu0 %v111
    %526 = vmatprep.subr.mxu0 0.0
    %527 = vmatpush1.msra.mxu0 %v112
    %528 = vmatprep.subr.mxu0 0.0
    %529 = vmatpush1.msra.mxu0 %v113
    %530 = vmatprep.subr.mxu0 0.0
    %531 = vmatpush1.msra.mxu0 %v114
    %532 = vmatprep.subr.mxu0 0.0
    %533 = vmatpush1.msra.mxu0 %v115
    %534 = vmatprep.subr.mxu0 0.0
    %535 = vmatpush1.msra.mxu0 %v116
    %536 = vmatprep.subr.mxu0 0.0
    %537 = vmatpush1.msra.mxu0 %v117
    %538 = vmatprep.subr.mxu0 0.0
    %539 = vmatpush1.msra.mxu0 %v118
    %540 = vmatprep.subr.mxu0 0.0
    %541 = vmatpush1.msra.mxu0 %v119
    %542 = vmatprep.subr.mxu0 0.0
    %543 = vmatpush1.msra.mxu0 %v120
    %544 = vmatprep.subr.mxu0 0.0
    %545 = vmatpush1.msra.mxu0 %v121
    %546 = vmatprep.subr.mxu0 0.0
    %547 = vmatpush1.msra.mxu0 %v122
    %548 = vmatprep.subr.mxu0 0.0
    %549 = vmatpush1.msra.mxu0 %v123
    %550 = vmatprep.subr.mxu0 0.0
    %551 = vmatpush1.msra.mxu0 %v124
    %552 = vmatprep.subr.mxu0 0.0
    %553 = vmatpush1.msra.mxu0 %v125
    %554 = vmatprep.subr.mxu0 0.0
    %555 = vmatpush1.msra.mxu0 %v126
    %556 = vmatprep.subr.mxu0 0.0
    %557 = vmatpush1.msra.mxu0 %v127
    %558 = vmatprep.subr.mxu0 0.0
    %559 = vmatpush1.msra.mxu0 %v128
    %560 = vmatprep.subr.mxu0 0.0
    %561 = vmatpush1.msra.mxu0 %v129
    %562 = vmatprep.subr.mxu0 0.0
    %563 = vmatpush1.msra.mxu0 %v130
    %564 = vmatprep.subr.mxu0 0.0
    %565 = vmatpush1.msra.mxu0 %v131
    %566 = vmatprep.subr.mxu0 0.0
    %567 = vmatpush1.msra.mxu0 %v132
    %568 = vmatprep.subr.mxu0 0.0
    %569 = vmatpush1.msra.mxu0 %v133
    %570 = vmatprep.subr.mxu0 0.0
    %571 = vmatpush1.msra.mxu0 %v134
    %572 = vmatprep.subr.mxu0 0.0
    %573 = vmatpush1.msra.mxu0 %v135
    %574 = vmatprep.subr.mxu0 0.0
    %575 = vmatpush1.msra.mxu0 %v136
    %576 = vmatprep.subr.mxu0 0.0
    %577 = vmatpush1.msra.mxu0 %v137
    %578 = vmatprep.subr.mxu0 0.0
    %579 = vmatpush1.msra.mxu0 %v138
    %580 = vmatprep.subr.mxu0 0.0
    %581 = vmatpush1.msra.mxu0 %v139
    %582 = vmatprep.mubr.f32.mxu0 %v365
    %583 = vmatmul.mubr.f32.gmra.mrb[0].mxu0 %v361
    %v584 = vpop.f32.mrb[0].mxu0
    %v585 = vadd.f32 %v515, %v584
    %v586 = vpop.f32.mrb[0].mxu0
    %587 = vdwg.mxu0
    %588 = vmatprep.subr.mxu0 0.0
    %589 = vmatpush1.msra.mxu0 %v140
    %590 = vmatprep.subr.mxu0 0.0
    %591 = vmatpush1.msra.mxu0 %v141
    %592 = vmatprep.subr.mxu0 0.0
    %593 = vmatpush1.msra.mxu0 %v142
    %594 = vmatprep.subr.mxu0 0.0
    %595 = vmatpush1.msra.mxu0 %v143
    %596 = vmatprep.subr.mxu0 0.0
    %597 = vmatpush1.msra.mxu0 %v144
    %598 = vmatprep.subr.mxu0 0.0
    %599 = vmatpush1.msra.mxu0 %v145
    %600 = vmatprep.subr.mxu0 0.0
    %601 = vmatpush1.msra.mxu0 %v146
    %602 = vmatprep.subr.mxu0 0.0
    %603 = vmatpush1.msra.mxu0 %v147
    %604 = vmatprep.subr.mxu0 0.0
    %605 = vmatpush1.msra.mxu0 %v148
    %606 = vmatprep.subr.mxu0 0.0
    %607 = vmatpush1.msra.mxu0 %v149
    %608 = vmatprep.subr.mxu0 0.0
    %609 = vmatpush1.msra.mxu0 %v150
    %610 = vmatprep.subr.mxu0 0.0
    %611 = vmatpush1.msra.mxu0 %v151
    %612 = vmatprep.subr.mxu0 0.0
    %613 = vmatpush1.msra.mxu0 %v152
    %614 = vmatprep.subr.mxu0 0.0
    %615 = vmatpush1.msra.mxu0 %v153
    %616 = vmatprep.subr.mxu0 0.0
    %617 = vmatpush1.msra.mxu0 %v154
    %618 = vmatprep.subr.mxu0 0.0
    %619 = vmatpush1.msra.mxu0 %v155
    %620 = vmatprep.subr.mxu0 0.0
    %621 = vmatpush1.msra.mxu0 %v156
    %622 = vmatprep.subr.mxu0 0.0
    %623 = vmatpush1.msra.mxu0 %v157
    %624 = vmatprep.subr.mxu0 0.0
    %625 = vmatpush1.msra.mxu0 %v158
    %626 = vmatprep.subr.mxu0 0.0
    %627 = vmatpush1.msra.mxu0 %v159
    %628 = vmatprep.subr.mxu0 0.0
    %629 = vmatpush1.msra.mxu0 %v160
    %630 = vmatprep.subr.mxu0 0.0
    %631 = vmatpush1.msra.mxu0 %v161
    %632 = vmatprep.subr.mxu0 0.0
    %633 = vmatpush1.msra.mxu0 %v162
    %634 = vmatprep.subr.mxu0 0.0
    %635 = vmatpush1.msra.mxu0 %v163
    %636 = vmatprep.subr.mxu0 0.0
    %637 = vmatpush1.msra.mxu0 %v164
    %638 = vmatprep.subr.mxu0 0.0
    %639 = vmatpush1.msra.mxu0 %v165
    %640 = vmatprep.subr.mxu0 0.0
    %641 = vmatpush1.msra.mxu0 %v166
    %642 = vmatprep.subr.mxu0 0.0
    %643 = vmatpush1.msra.mxu0 %v167
    %644 = vmatprep.subr.mxu0 0.0
    %645 = vmatpush1.msra.mxu0 %v168
    %646 = vmatprep.subr.mxu0 0.0
    %647 = vmatpush1.msra.mxu0 %v169
    %648 = vmatprep.subr.mxu0 0.0
    %649 = vmatpush1.msra.mxu0 %v170
    %650 = vmatprep.subr.mxu0 0.0
    %651 = vmatpush1.msra.mxu0 %v171
    %652 = vmatprep.mubr.f32.mxu0 %v373
    %653 = vmatmul.mubr.f32.gmra.mrb[0].mxu0 %v369
    %v654 = vpop.f32.mrb[0].mxu0
    %v655 = vadd.f32 %v585, %v654
    %v656 = vpop.f32.mrb[0].mxu0
    %657 = vdwg.mxu0
    %658 = vmatprep.subr.mxu0 0.0
    %659 = vmatpush1.msra.mxu0 %v172
    %660 = vmatprep.subr.mxu0 0.0
    %661 = vmatpush1.msra.mxu0 %v173
    %662 = vmatprep.subr.mxu0 0.0
    %663 = vmatpush1.msra.mxu0 %v174
    %664 = vmatprep.subr.mxu0 0.0
    %665 = vmatpush1.msra.mxu0 %v175
    %666 = vmatprep.subr.mxu0 0.0
    %667 = vmatpush1.msra.mxu0 %v176
    %668 = vmatprep.subr.mxu0 0.0
    %669 = vmatpush1.msra.mxu0 %v177
    %670 = vmatprep.subr.mxu0 0.0
    %671 = vmatpush1.msra.mxu0 %v178
    %672 = vmatprep.subr.mxu0 0.0
    %673 = vmatpush1.msra.mxu0 %v179
    %674 = vmatprep.subr.mxu0 0.0
    %675 = vmatpush1.msra.mxu0 %v180
    %676 = vmatprep.subr.mxu0 0.0
    %677 = vmatpush1.msra.mxu0 %v181
    %678 = vmatprep.subr.mxu0 0.0
    %679 = vmatpush1.msra.mxu0 %v182
    %680 = vmatprep.subr.mxu0 0.0
    %681 = vmatpush1.msra.mxu0 %v183
    %682 = vmatprep.subr.mxu0 0.0
    %683 = vmatpush1.msra.mxu0 %v184
    %684 = vmatprep.subr.mxu0 0.0
    %685 = vmatpush1.msra.mxu0 %v185
    %686 = vmatprep.subr.mxu0 0.0
    %687 = vmatpush1.msra.mxu0 %v186
    %688 = vmatprep.subr.mxu0 0.0
    %689 = vmatpush1.msra.mxu0 %v187
    %690 = vmatprep.subr.mxu0 0.0
    %691 = vmatpush1.msra.mxu0 0.0
    %692 = vmatprep.subr.mxu0 0.0
    %693 = vmatpush1.msra.mxu0 0.0
    %694 = vmatprep.subr.mxu0 0.0
    %695 = vmatpush1.msra.mxu0 0.0
    %696 = vmatprep.subr.mxu0 0.0
    %697 = vmatpush1.msra.mxu0 0.0
    %698 = vmatprep.subr.mxu0 0.0
    %699 = vmatpush1.msra.mxu0 0.0
    %700 = vmatprep.subr.mxu0 0.0
    %701 = vmatpush1.msra.mxu0 0.0
    %702 = vmatprep.subr.mxu0 0.0
    %703 = vmatpush1.msra.mxu0 0.0
    %704 = vmatprep.subr.mxu0 0.0
    %705 = vmatpush1.msra.mxu0 0.0
    %706 = vmatprep.subr.mxu0 0.0
    %707 = vmatpush1.msra.mxu0 0.0
    %708 = vmatprep.subr.mxu0 0.0
    %709 = vmatpush1.msra.mxu0 0.0
    %710 = vmatprep.subr.mxu0 0.0
    %711 = vmatpush1.msra.mxu0 0.0
    %712 = vmatprep.subr.mxu0 0.0
    %713 = vmatpush1.msra.mxu0 0.0
    %714 = vmatprep.subr.mxu0 0.0
    %715 = vmatpush1.msra.mxu0 0.0
    %716 = vmatprep.subr.mxu0 0.0
    %717 = vmatpush1.msra.mxu0 0.0
    %718 = vmatprep.subr.mxu0 0.0
    %719 = vmatpush1.msra.mxu0 0.0
    %720 = vmatprep.subr.mxu0 0.0
    %721 = vmatpush1.msra.mxu0 0.0
    %722 = vmatprep.mubr.f32.mxu0 0.0
    %723 = vmatmul.mubr.f32.gmra.mrb[0].mxu0 %v377
    %v724 = vpop.f32.mrb[0].mxu0
    %v725 = vadd.f32 %v655, %v724
    %v726 = vpop.f32.mrb[0].mxu0
    %727 = vdwg.mxu0
    %v728 = vld [vmem:[#allocation5] sm:$0xff]
    %v729 = vld [vmem:[#allocation5 + $0x8] sm:$0xff]
    %v730 = vld [vmem:[#allocation5 + $0x10] sm:$0xff]
    %v731 = vld [vmem:[#allocation5 + $0x18] sm:$0xff]
    %v732 = vld [vmem:[#allocation5 + $0x20] sm:$0xff]
    %v733 = vld [vmem:[#allocation5 + $0x28] sm:$0xff]
    %v734 = vld [vmem:[#allocation5 + $0x30] sm:$0xff]
    %v735 = vld [vmem:[#allocation5 + $0x38] sm:$0xff]
    %v736 = vld [vmem:[#allocation5 + $0x40] sm:$0xff]
    %v737 = vld [vmem:[#allocation5 + $0x48] sm:$0xff]
    %v738 = vld [vmem:[#allocation5 + $0x50] sm:$0xff]
    %v739 = vld [vmem:[#allocation5 + $0x58] sm:$0xff]
    %v740 = vld [vmem:[#allocation5 + $0x60] sm:$0xff]
    %v741 = vld [vmem:[#allocation5 + $0x68] sm:$0xff]
    %v742 = vld [vmem:[#allocation5 + $0x70] sm:$0xff]
    %v743 = vld [vmem:[#allocation5 + $0x78] sm:$0xff]
    %v744 = vld [vmem:[#allocation5 + $0x80] sm:$0xff]
    %v745 = vld [vmem:[#allocation5 + $0x88] sm:$0xff]
    %v746 = vld [vmem:[#allocation5 + $0x90] sm:$0xff]
    %v747 = vld [vmem:[#allocation5 + $0x98] sm:$0xff]
    %v748 = vld [vmem:[#allocation5 + $0xa0] sm:$0xff]
    %v749 = vld [vmem:[#allocation5 + $0xa8] sm:$0xff]
    %v750 = vld [vmem:[#allocation5 + $0xb0] sm:$0xff]
    %v751 = vld [vmem:[#allocation5 + $0xb8] sm:$0xff]
    %v752 = vld [vmem:[#allocation5 + $0xc0] sm:$0xff]
    %v753 = vld [vmem:[#allocation5 + $0xc8] sm:$0xff]
    %v754 = vld [vmem:[#allocation5 + $0xd0] sm:$0xff]
    %v755 = vld [vmem:[#allocation5 + $0xd8] sm:$0xff]
    %v756 = vld [vmem:[#allocation5 + $0xe0] sm:$0xff]
    %v757 = vld [vmem:[#allocation5 + $0xe8] sm:$0xff]
    %v758 = vld [vmem:[#allocation5 + $0xf0] sm:$0xff]
    %v759 = vld [vmem:[#allocation5 + $0xf8] sm:$0xff]
    %v760 = vld [vmem:[#allocation5 + $0x100] sm:$0xff]
    %v761 = vld [vmem:[#allocation5 + $0x108] sm:$0xff]
    %v762 = vld [vmem:[#allocation5 + $0x110] sm:$0xff]
    %v763 = vld [vmem:[#allocation5 + $0x118] sm:$0xff]
    %v764 = vld [vmem:[#allocation5 + $0x120] sm:$0xff]
    %v765 = vld [vmem:[#allocation5 + $0x128] sm:$0xff]
    %v766 = vld [vmem:[#allocation5 + $0x130] sm:$0xff]
    %v767 = vld [vmem:[#allocation5 + $0x138] sm:$0xff]
    %v768 = vld [vmem:[#allocation5 + $0x140] sm:$0xff]
    %v769 = vld [vmem:[#allocation5 + $0x148] sm:$0xff]
    %v770 = vld [vmem:[#allocation5 + $0x150] sm:$0xff]
    %v771 = vld [vmem:[#allocation5 + $0x158] sm:$0xff]
    %v772 = vld [vmem:[#allocation5 + $0x160] sm:$0xff]
    %v773 = vld [vmem:[#allocation5 + $0x168] sm:$0xff]
    %v774 = vld [vmem:[#allocation5 + $0x170] sm:$0xff]
    %v775 = vld [vmem:[#allocation5 + $0x178] sm:$0xff]
    %v776 = vld [vmem:[#allocation5 + $0x180] sm:$0xff]
    %v777 = vld [vmem:[#allocation5 + $0x188] sm:$0xff]
    %v778 = vld [vmem:[#allocation5 + $0x190] sm:$0xff]
    %v779 = vld [vmem:[#allocation5 + $0x198] sm:$0xff]
    %v780 = vld [vmem:[#allocation5 + $0x1a0] sm:$0xff]
    %v781 = vld [vmem:[#allocation5 + $0x1a8] sm:$0xff]
    %v782 = vld [vmem:[#allocation5 + $0x1b0] sm:$0xff]
    %v783 = vld [vmem:[#allocation5 + $0x1b8] sm:$0xff]
    %v784 = vld [vmem:[#allocation5 + $0x1c0] sm:$0xff]
    %v785 = vld [vmem:[#allocation5 + $0x1c8] sm:$0xff]
    %v786 = vld [vmem:[#allocation5 + $0x1d0] sm:$0xff]
    %v787 = vld [vmem:[#allocation5 + $0x1d8] sm:$0xff]
    %v788 = vld [vmem:[#allocation5 + $0x1e0] sm:$0xff]
    %v789 = vld [vmem:[#allocation5 + $0x1e8] sm:$0xff]
    %v790 = vld [vmem:[#allocation5 + $0x1f0] sm:$0xff]
    %v791 = vld [vmem:[#allocation5 + $0x1f8] sm:$0xff]
    %v792 = vld [vmem:[#allocation5 + $0x200] sm:$0xff]
    %v793 = vld [vmem:[#allocation5 + $0x208] sm:$0xff]
    %v794 = vld [vmem:[#allocation5 + $0x210] sm:$0xff]
    %v795 = vld [vmem:[#allocation5 + $0x218] sm:$0xff]
    %v796 = vld [vmem:[#allocation5 + $0x220] sm:$0xff]
    %v797 = vld [vmem:[#allocation5 + $0x228] sm:$0xff]
    %v798 = vld [vmem:[#allocation5 + $0x230] sm:$0xff]
    %v799 = vld [vmem:[#allocation5 + $0x238] sm:$0xff]
    %v800 = vld [vmem:[#allocation5 + $0x240] sm:$0xff]
    %v801 = vld [vmem:[#allocation5 + $0x248] sm:$0xff]
    %v802 = vld [vmem:[#allocation5 + $0x250] sm:$0xff]
    %v803 = vld [vmem:[#allocation5 + $0x258] sm:$0xff]
    %v804 = vld [vmem:[#allocation5 + $0x260] sm:$0xff]
    %v805 = vld [vmem:[#allocation5 + $0x268] sm:$0xff]
    %v806 = vld [vmem:[#allocation5 + $0x270] sm:$0xff]
    %v807 = vld [vmem:[#allocation5 + $0x278] sm:$0xff]
    %v808 = vld [vmem:[#allocation5 + $0x280] sm:$0xff]
    %v809 = vld [vmem:[#allocation5 + $0x288] sm:$0xff]
    %v810 = vld [vmem:[#allocation5 + $0x290] sm:$0xff]
    %v811 = vld [vmem:[#allocation5 + $0x298] sm:$0xff]
    %v812 = vld [vmem:[#allocation5 + $0x2a0] sm:$0xff]
    %v813 = vld [vmem:[#allocation5 + $0x2a8] sm:$0xff]
    %v814 = vld [vmem:[#allocation5 + $0x2b0] sm:$0xff]
    %v815 = vld [vmem:[#allocation5 + $0x2b8] sm:$0xff]
    %v816 = vld [vmem:[#allocation5 + $0x2c0] sm:$0xff]
    %v817 = vld [vmem:[#allocation5 + $0x2c8] sm:$0xff]
    %v818 = vld [vmem:[#allocation5 + $0x2d0] sm:$0xff]
    %v819 = vld [vmem:[#allocation5 + $0x2d8] sm:$0xff]
    %v820 = vld [vmem:[#allocation5 + $0x2e0] sm:$0xff]
    %v821 = vld [vmem:[#allocation5 + $0x2e8] sm:$0xff]
    %v822 = vld [vmem:[#allocation5 + $0x2f0] sm:$0xff]
    %v823 = vld [vmem:[#allocation5 + $0x2f8] sm:$0xff]
    %v824 = vld [vmem:[#allocation5 + $0x300] sm:$0xff]
    %v825 = vld [vmem:[#allocation5 + $0x308] sm:$0xff]
    %v826 = vld [vmem:[#allocation5 + $0x310] sm:$0xff]
    %v827 = vld [vmem:[#allocation5 + $0x318] sm:$0xff]
    %v828 = vld [vmem:[#allocation5 + $0x320] sm:$0xff]
    %v829 = vld [vmem:[#allocation5 + $0x328] sm:$0xff]
    %v830 = vld [vmem:[#allocation5 + $0x330] sm:$0xff]
    %v831 = vld [vmem:[#allocation5 + $0x338] sm:$0xff]
    %v832 = vld [vmem:[#allocation5 + $0x340] sm:$0xff]
    %v833 = vld [vmem:[#allocation5 + $0x348] sm:$0xff]
    %v834 = vld [vmem:[#allocation5 + $0x350] sm:$0xff]
    %v835 = vld [vmem:[#allocation5 + $0x358] sm:$0xff]
    %v836 = vld [vmem:[#allocation5 + $0x360] sm:$0xff]
    %v837 = vld [vmem:[#allocation5 + $0x368] sm:$0xff]
    %v838 = vld [vmem:[#allocation5 + $0x370] sm:$0xff]
    %v839 = vld [vmem:[#allocation5 + $0x378] sm:$0xff]
    %v840 = vld [vmem:[#allocation5 + $0x380] sm:$0xff]
    %v841 = vld [vmem:[#allocation5 + $0x388] sm:$0xff]
    %v842 = vld [vmem:[#allocation5 + $0x390] sm:$0xff]
    %v843 = vld [vmem:[#allocation5 + $0x398] sm:$0xff]
    %v844 = vld [vmem:[#allocation5 + $0x3a0] sm:$0xff]
    %v845 = vld [vmem:[#allocation5 + $0x3a8] sm:$0xff]
    %v846 = vld [vmem:[#allocation5 + $0x3b0] sm:$0xff]
    %v847 = vld [vmem:[#allocation5 + $0x3b8] sm:$0xff]
    %v848 = vld [vmem:[#allocation5 + $0x3c0] sm:$0xff]
    %v849 = vld [vmem:[#allocation5 + $0x3c8] sm:$0xff]
    %v850 = vld [vmem:[#allocation5 + $0x3d0] sm:$0xff]
    %v851 = vld [vmem:[#allocation5 + $0x3d8] sm:$0xff]
    %v852 = vld [vmem:[#allocation5 + $0x3e0] sm:$0xff]
    %v853 = vld [vmem:[#allocation5 + $0x3e8] sm:$0xff]
    %v854 = vld [vmem:[#allocation5 + $0x3f0] sm:$0xff]
    %v855 = vld [vmem:[#allocation5 + $0x3f8] sm:$0xff]
    %v856 = vld [vmem:[#allocation5 + $0x400] sm:$0xff]
    %v857 = vld [vmem:[#allocation5 + $0x408] sm:$0xff]
    %v858 = vld [vmem:[#allocation5 + $0x410] sm:$0xff]
    %v859 = vld [vmem:[#allocation5 + $0x418] sm:$0xff]
    %v860 = vld [vmem:[#allocation5 + $0x420] sm:$0xff]
    %v861 = vld [vmem:[#allocation5 + $0x428] sm:$0xff]
    %v862 = vld [vmem:[#allocation5 + $0x430] sm:$0xff]
    %v863 = vld [vmem:[#allocation5 + $0x438] sm:$0xff]
    %v864 = vld [vmem:[#allocation5 + $0x440] sm:$0xff]
    %v865 = vld [vmem:[#allocation5 + $0x448] sm:$0xff]
    %v866 = vld [vmem:[#allocation5 + $0x450] sm:$0xff]
    %v867 = vld [vmem:[#allocation5 + $0x458] sm:$0xff]
    %v868 = vld [vmem:[#allocation5 + $0x460] sm:$0xff]
    %v869 = vld [vmem:[#allocation5 + $0x468] sm:$0xff]
    %v870 = vld [vmem:[#allocation5 + $0x470] sm:$0xff]
    %v871 = vld [vmem:[#allocation5 + $0x478] sm:$0xff]
    %v872 = vxor.u32 %v725, 2147483648
    %v873 = vmul.f32 %v872, 1.442695
    %v874 = vpow.pop %v873
    %v875 = vadd.f32 %v874, 1.0
    %v876 = vrcp.pop %v875
    %v877 = vmul.f32 1.0, %v876
    %v878 = vmul.f32 %v725, %v877
    %vm879 = vcmp.ge.f32.partialorder %v725, -2.2
    %vm880 = vcmp.lt.f32.partialorder %v725, -1.8
    %vm881 = vmand %vm879, %vm880
    %v882 = vsel %vm881, 1, 0
    %v883 = vcvt.s32.f32 %v882
    %vm884 = vcmp.ge.f32.partialorder %v725, -1.8
    %vm885 = vcmp.lt.f32.partialorder %v725, -1.4
    %vm886 = vmand %vm884, %vm885
    %v887 = vsel %vm886, 1, 0
    %v888 = vcvt.s32.f32 %v887
    %vm889 = vcmp.ge.f32.partialorder %v725, -1.4
    %vm890 = vcmp.lt.f32.partialorder %v725, -1.0
    %vm891 = vmand %vm889, %vm890
    %v892 = vsel %vm891, 1, 0
    %v893 = vcvt.s32.f32 %v892
    %vm894 = vcmp.ge.f32.partialorder %v725, -1.0
    %vm895 = vcmp.lt.f32.partialorder %v725, -0.6
    %vm896 = vmand %vm894, %vm895
    %v897 = vsel %vm896, 1, 0
    %v898 = vcvt.s32.f32 %v897
    %vm899 = vcmp.ge.f32.partialorder %v725, -0.6
    %vm900 = vcmp.lt.f32.partialorder %v725, -0.2
    %vm901 = vmand %vm899, %vm900
    %v902 = vsel %vm901, 1, 0
    %v903 = vcvt.s32.f32 %v902
    %vm904 = vcmp.ge.f32.partialorder %v725, -0.2
    %vm905 = vcmp.lt.f32.partialorder %v725, 0.2
    %vm906 = vmand %vm904, %vm905
    %v907 = vsel %vm906, 1, 0
    %v908 = vcvt.s32.f32 %v907
    %vm909 = vcmp.ge.f32.partialorder %v725, 0.2
    %vm910 = vcmp.lt.f32.partialorder %v725, 0.6
    %vm911 = vmand %vm909, %vm910
    %v912 = vsel %vm911, 1, 0
    %v913 = vcvt.s32.f32 %v912
    %vm914 = vcmp.ge.f32.partialorder %v725, 0.6
    %vm915 = vcmp.lt.f32.partialorder %v725, 1.0
    %vm916 = vmand %vm914, %vm915
    %v917 = vsel %vm916, 1, 0
    %v918 = vcvt.s32.f32 %v917
    %vm919 = vcmp.ge.f32.partialorder %v725, 1.0
    %vm920 = vcmp.lt.f32.partialorder %v725, 1.4
    %vm921 = vmand %vm919, %vm920
    %v922 = vsel %vm921, 1, 0
    %v923 = vcvt.s32.f32 %v922
    %vm924 = vcmp.ge.f32.partialorder %v725, 1.4
    %vm925 = vcmp.lt.f32.partialorder %v725, 1.8
    %vm926 = vmand %vm924, %vm925
    %v927 = vsel %vm926, 1, 0
    %v928 = vcvt.s32.f32 %v927
    %vm929 = vcmp.ge.f32.partialorder %v725, 1.8
    %vm930 = vcmp.lt.f32.partialorder %v725, 2.2
    %vm931 = vmand %vm929, %vm930
    %v932 = vsel %vm931, 1, 0
    %v933 = vcvt.s32.f32 %v932
    %v934 = vsub.f32 %v725, -2.2
    %v935 = vmul.f32 %v934, %v883
    %v936 = vsub.f32 -1.4, %v725
    %v937 = vmul.f32 %v936, %v888
    %v938 = vadd.f32 %v935, %v937
    %v939 = vmul.f32 %v938, 2.5
    %v940 = vsub.f32 %v725, -1.8
    %v941 = vmul.f32 %v940, %v888
    %v942 = vsub.f32 -1.0, %v725
    %v943 = vmul.f32 %v942, %v893
    %v944 = vadd.f32 %v941, %v943
    %v945 = vmul.f32 %v944, 2.5
    %v946 = vsub.f32 %v725, -1.4
    %v947 = vmul.f32 %v946, %v893
    %v948 = vsub.f32 -0.6, %v725
    %v949 = vmul.f32 %v948, %v898
    %v950 = vadd.f32 %v947, %v949
    %v951 = vmul.f32 %v950, 2.5
    %v952 = vsub.f32 %v725, -1.0
    %v953 = vmul.f32 %v952, %v898
    %v954 = vsub.f32 -0.2, %v725
    %v955 = vmul.f32 %v954, %v903
    %v956 = vadd.f32 %v953, %v955
    %v957 = vmul.f32 %v956, 2.5
    %v958 = vsub.f32 %v725, -0.6
    %v959 = vmul.f32 %v958, %v903
    %v960 = vsub.f32 0.2, %v725
    %v961 = vmul.f32 %v960, %v908
    %v962 = vadd.f32 %v959, %v961
    %v963 = vmul.f32 %v962, 2.5
    %v964 = vsub.f32 %v725, -0.2
    %v965 = vmul.f32 %v964, %v908
    %v966 = vsub.f32 0.6, %v725
    %v967 = vmul.f32 %v966, %v913
    %v968 = vadd.f32 %v965, %v967
    %v969 = vmul.f32 %v968, 2.5
    %v970 = vsub.f32 %v725, 0.2
    %v971 = vmul.f32 %v970, %v913
    %v972 = vsub.f32 1.0, %v725
    %v973 = vmul.f32 %v972, %v918
    %v974 = vadd.f32 %v971, %v973
    %v975 = vmul.f32 %v974, 2.5
    %v976 = vsub.f32 %v725, 0.6
    %v977 = vmul.f32 %v976, %v918
    %v978 = vsub.f32 1.4, %v725
    %v979 = vmul.f32 %v978, %v923
    %v980 = vadd.f32 %v977, %v979
    %v981 = vmul.f32 %v980, 2.5
    %v982 = vsub.f32 %v725, 1.0
    %v983 = vmul.f32 %v982, %v923
    %v984 = vsub.f32 1.8, %v725
    %v985 = vmul.f32 %v984, %v928
    %v986 = vadd.f32 %v983, %v985
    %v987 = vmul.f32 %v986, 2.5
    %v988 = vsub.f32 %v725, 1.4
    %v989 = vmul.f32 %v988, %v928
    %v990 = vsub.f32 2.2, %v725
    %v991 = vmul.f32 %v990, %v933
    %v992 = vadd.f32 %v989, %v991
    %v993 = vmul.f32 %v992, 2.5
    %v994 = vmul.f32 %v934, %v939
    %v995 = vmul.f32 %v942, %v945
    %v996 = vadd.f32 %v994, %v995
    %v997 = vmul.f32 %v996, 1.25
    %v998 = vmul.f32 %v940, %v945
    %v999 = vmul.f32 %v948, %v951
    %v1000 = vadd.f32 %v998, %v999
    %v1001 = vmul.f32 %v1000, 1.25
    %v1002 = vmul.f32 %v946, %v951
    %v1003 = vmul.f32 %v954, %v957
    %v1004 = vadd.f32 %v1002, %v1003
    %v1005 = vmul.f32 %v1004, 1.25
    %v1006 = vmul.f32 %v952, %v957
    %v1007 = vmul.f32 %v960, %v963
    %v1008 = vadd.f32 %v1006, %v1007
    %v1009 = vmul.f32 %v1008, 1.25
    %v1010 = vmul.f32 %v958, %v963
    %v1011 = vmul.f32 %v966, %v969
    %v1012 = vadd.f32 %v1010, %v1011
    %v1013 = vmul.f32 %v1012, 1.25
    %v1014 = vmul.f32 %v964, %v969
    %v1015 = vmul.f32 %v972, %v975
    %v1016 = vadd.f32 %v1014, %v1015
    %v1017 = vmul.f32 %v1016, 1.25
    %v1018 = vmul.f32 %v970, %v975
    %v1019 = vmul.f32 %v978, %v981
    %v1020 = vadd.f32 %v1018, %v1019
    %v1021 = vmul.f32 %v1020, 1.25
    %v1022 = vmul.f32 %v976, %v981
    %v1023 = vmul.f32 %v984, %v987
    %v1024 = vadd.f32 %v1022, %v1023
    %v1025 = vmul.f32 %v1024, 1.25
    %v1026 = vmul.f32 %v982, %v987
    %v1027 = vmul.f32 %v990, %v993
    %v1028 = vadd.f32 %v1026, %v1027
    %v1029 = vmul.f32 %v1028, 1.25
    %v1030 = vmul.f32 %v934, %v997
    %v1031 = vmul.f32 %v948, %v1001
    %v1032 = vadd.f32 %v1030, %v1031
    %v1033 = vmul.f32 %v1032, 0.8333333
    %v1034 = vmul.f32 %v940, %v1001
    %v1035 = vmul.f32 %v954, %v1005
    %v1036 = vadd.f32 %v1034, %v1035
    %v1037 = vmul.f32 %v1036, 0.8333333
    %v1038 = vmul.f32 %v946, %v1005
    %v1039 = vmul.f32 %v960, %v1009
    %v1040 = vadd.f32 %v1038, %v1039
    %v1041 = vmul.f32 %v1040, 0.8333333
    %v1042 = vmul.f32 %v952, %v1009
    %v1043 = vmul.f32 %v966, %v1013
    %v1044 = vadd.f32 %v1042, %v1043
    %v1045 = vmul.f32 %v1044, 0.8333333
    %v1046 = vmul.f32 %v958, %v1013
    %v1047 = vmul.f32 %v972, %v1017
    %v1048 = vadd.f32 %v1046, %v1047
    %v1049 = vmul.f32 %v1048, 0.8333333
    %v1050 = vmul.f32 %v964, %v1017
    %v1051 = vmul.f32 %v978, %v1021
    %v1052 = vadd.f32 %v1050, %v1051
    %v1053 = vmul.f32 %v1052, 0.8333333
    %v1054 = vmul.f32 %v970, %v1021
    %v1055 = vmul.f32 %v984, %v1025
    %v1056 = vadd.f32 %v1054, %v1055
    %v1057 = vmul.f32 %v1056, 0.8333333
    %v1058 = vmul.f32 %v976, %v1025
    %v1059 = vmul.f32 %v990, %v1029
    %v1060 = vadd.f32 %v1058, %v1059
    %v1061 = vmul.f32 %v1060, 0.8333333
    %1062 = vmatprep.subr.mxu0 0.0
    %1063 = vmatpush1.msra.mxu0 %v728
    %1064 = vmatprep.subr.mxu0 0.0
    %1065 = vmatpush1.msra.mxu0 %v729
    %1066 = vmatprep.subr.mxu0 0.0
    %1067 = vmatpush1.msra.mxu0 %v730
    %1068 = vmatprep.subr.mxu0 0.0
    %1069 = vmatpush1.msra.mxu0 %v731
    %1070 = vmatprep.subr.mxu0 0.0
    %1071 = vmatpush1.msra.mxu0 %v732
    %1072 = vmatprep.subr.mxu0 0.0
    %1073 = vmatpush1.msra.mxu0 %v733
    %1074 = vmatprep.subr.mxu0 0.0
    %1075 = vmatpush1.msra.mxu0 %v734
    %1076 = vmatprep.subr.mxu0 0.0
    %1077 = vmatpush1.msra.mxu0 %v735
    %1078 = vmatprep.subr.mxu0 0.0
    %1079 = vmatpush1.msra.mxu0 %v736
    %1080 = vmatprep.subr.mxu0 0.0
    %1081 = vmatpush1.msra.mxu0 %v737
    %1082 = vmatprep.subr.mxu0 0.0
    %1083 = vmatpush1.msra.mxu0 %v738
    %1084 = vmatprep.subr.mxu0 0.0
    %1085 = vmatpush1.msra.mxu0 %v739
    %1086 = vmatprep.subr.mxu0 0.0
    %1087 = vmatpush1.msra.mxu0 %v740
    %1088 = vmatprep.subr.mxu0 0.0
    %1089 = vmatpush1.msra.mxu0 %v741
    %1090 = vmatprep.subr.mxu0 0.0
    %1091 = vmatpush1.msra.mxu0 %v742
    %1092 = vmatprep.subr.mxu0 0.0
    %1093 = vmatpush1.msra.mxu0 %v743
    %1094 = vmatprep.subr.mxu0 0.0
    %1095 = vmatpush1.msra.mxu0 %v744
    %1096 = vmatprep.subr.mxu0 0.0
    %1097 = vmatpush1.msra.mxu0 %v745
    %1098 = vmatprep.subr.mxu0 0.0
    %1099 = vmatpush1.msra.mxu0 %v746
    %1100 = vmatprep.subr.mxu0 0.0
    %1101 = vmatpush1.msra.mxu0 %v747
    %1102 = vmatprep.subr.mxu0 0.0
    %1103 = vmatpush1.msra.mxu0 %v748
    %1104 = vmatprep.subr.mxu0 0.0
    %1105 = vmatpush1.msra.mxu0 %v749
    %1106 = vmatprep.subr.mxu0 0.0
    %1107 = vmatpush1.msra.mxu0 %v750
    %1108 = vmatprep.subr.mxu0 0.0
    %1109 = vmatpush1.msra.mxu0 %v751
    %1110 = vmatprep.subr.mxu0 0.0
    %1111 = vmatpush1.msra.mxu0 %v752
    %1112 = vmatprep.subr.mxu0 0.0
    %1113 = vmatpush1.msra.mxu0 %v753
    %1114 = vmatprep.subr.mxu0 0.0
    %1115 = vmatpush1.msra.mxu0 %v754
    %1116 = vmatprep.subr.mxu0 0.0
    %1117 = vmatpush1.msra.mxu0 %v755
    %1118 = vmatprep.subr.mxu0 0.0
    %1119 = vmatpush1.msra.mxu0 %v756
    %1120 = vmatprep.subr.mxu0 0.0
    %1121 = vmatpush1.msra.mxu0 %v757
    %1122 = vmatprep.subr.mxu0 0.0
    %1123 = vmatpush1.msra.mxu0 %v758
    %1124 = vmatprep.subr.mxu0 0.0
    %1125 = vmatpush1.msra.mxu0 %v759
    %1126 = vmatprep.mubr.f32.mxu0 %v1033
    %1127 = vmatmul.mubr.f32.gmra.mrb[0].mxu0 %v878
    %v1128 = vpop.f32.mrb[0].mxu0
    %v1129 = vadd.f32 0.0, %v1128
    %v1130 = vpop.f32.mrb[0].mxu0
    %1131 = vdwg.mxu0
    %1132 = vmatprep.subr.mxu0 0.0
    %1133 = vmatpush1.msra.mxu0 %v760
    %1134 = vmatprep.subr.mxu0 0.0
    %1135 = vmatpush1.msra.mxu0 %v761
    %1136 = vmatprep.subr.mxu0 0.0
    %1137 = vmatpush1.msra.mxu0 %v762
    %1138 = vmatprep.subr.mxu0 0.0
    %1139 = vmatpush1.msra.mxu0 %v763
    %1140 = vmatprep.subr.mxu0 0.0
    %1141 = vmatpush1.msra.mxu0 %v764
    %1142 = vmatprep.subr.mxu0 0.0
    %1143 = vmatpush1.msra.mxu0 %v765
    %1144 = vmatprep.subr.mxu0 0.0
    %1145 = vmatpush1.msra.mxu0 %v766
    %1146 = vmatprep.subr.mxu0 0.0
    %1147 = vmatpush1.msra.mxu0 %v767
    %1148 = vmatprep.subr.mxu0 0.0
    %1149 = vmatpush1.msra.mxu0 %v768
    %1150 = vmatprep.subr.mxu0 0.0
    %1151 = vmatpush1.msra.mxu0 %v769
    %1152 = vmatprep.subr.mxu0 0.0
    %1153 = vmatpush1.msra.mxu0 %v770
    %1154 = vmatprep.subr.mxu0 0.0
    %1155 = vmatpush1.msra.mxu0 %v771
    %1156 = vmatprep.subr.mxu0 0.0
    %1157 = vmatpush1.msra.mxu0 %v772
    %1158 = vmatprep.subr.mxu0 0.0
    %1159 = vmatpush1.msra.mxu0 %v773
    %1160 = vmatprep.subr.mxu0 0.0
    %1161 = vmatpush1.msra.mxu0 %v774
    %1162 = vmatprep.subr.mxu0 0.0
    %1163 = vmatpush1.msra.mxu0 %v775
    %1164 = vmatprep.subr.mxu0 0.0
    %1165 = vmatpush1.msra.mxu0 %v776
    %1166 = vmatprep.subr.mxu0 0.0
    %1167 = vmatpush1.msra.mxu0 %v777
    %1168 = vmatprep.subr.mxu0 0.0
    %1169 = vmatpush1.msra.mxu0 %v778
    %1170 = vmatprep.subr.mxu0 0.0
    %1171 = vmatpush1.msra.mxu0 %v779
    %1172 = vmatprep.subr.mxu0 0.0
    %1173 = vmatpush1.msra.mxu0 %v780
    %1174 = vmatprep.subr.mxu0 0.0
    %1175 = vmatpush1.msra.mxu0 %v781
    %1176 = vmatprep.subr.mxu0 0.0
    %1177 = vmatpush1.msra.mxu0 %v782
    %1178 = vmatprep.subr.mxu0 0.0
    %1179 = vmatpush1.msra.mxu0 %v783
    %1180 = vmatprep.subr.mxu0 0.0
    %1181 = vmatpush1.msra.mxu0 %v784
    %1182 = vmatprep.subr.mxu0 0.0
    %1183 = vmatpush1.msra.mxu0 %v785
    %1184 = vmatprep.subr.mxu0 0.0
    %1185 = vmatpush1.msra.mxu0 %v786
    %1186 = vmatprep.subr.mxu0 0.0
    %1187 = vmatpush1.msra.mxu0 %v787
    %1188 = vmatprep.subr.mxu0 0.0
    %1189 = vmatpush1.msra.mxu0 %v788
    %1190 = vmatprep.subr.mxu0 0.0
    %1191 = vmatpush1.msra.mxu0 %v789
    %1192 = vmatprep.subr.mxu0 0.0
    %1193 = vmatpush1.msra.mxu0 %v790
    %1194 = vmatprep.subr.mxu0 0.0
    %1195 = vmatpush1.msra.mxu0 %v791
    %1196 = vmatprep.mubr.f32.mxu0 %v1041
    %1197 = vmatmul.mubr.f32.gmra.mrb[0].mxu0 %v1037
    %v1198 = vpop.f32.mrb[0].mxu0
    %v1199 = vadd.f32 %v1129, %v1198
    %v1200 = vpop.f32.mrb[0].mxu0
    %1201 = vdwg.mxu0
    %1202 = vmatprep.subr.mxu0 0.0
    %1203 = vmatpush1.msra.mxu0 %v792
    %1204 = vmatprep.subr.mxu0 0.0
    %1205 = vmatpush1.msra.mxu0 %v793
    %1206 = vmatprep.subr.mxu0 0.0
    %1207 = vmatpush1.msra.mxu0 %v794
    %1208 = vmatprep.subr.mxu0 0.0
    %1209 = vmatpush1.msra.mxu0 %v795
    %1210 = vmatprep.subr.mxu0 0.0
    %1211 = vmatpush1.msra.mxu0 %v796
    %1212 = vmatprep.subr.mxu0 0.0
    %1213 = vmatpush1.msra.mxu0 %v797
    %1214 = vmatprep.subr.mxu0 0.0
    %1215 = vmatpush1.msra.mxu0 %v798
    %1216 = vmatprep.subr.mxu0 0.0
    %1217 = vmatpush1.msra.mxu0 %v799
    %1218 = vmatprep.subr.mxu0 0.0
    %1219 = vmatpush1.msra.mxu0 %v800
    %1220 = vmatprep.subr.mxu0 0.0
    %1221 = vmatpush1.msra.mxu0 %v801
    %1222 = vmatprep.subr.mxu0 0.0
    %1223 = vmatpush1.msra.mxu0 %v802
    %1224 = vmatprep.subr.mxu0 0.0
    %1225 = vmatpush1.msra.mxu0 %v803
    %1226 = vmatprep.subr.mxu0 0.0
    %1227 = vmatpush1.msra.mxu0 %v804
    %1228 = vmatprep.subr.mxu0 0.0
    %1229 = vmatpush1.msra.mxu0 %v805
    %1230 = vmatprep.subr.mxu0 0.0
    %1231 = vmatpush1.msra.mxu0 %v806
    %1232 = vmatprep.subr.mxu0 0.0
    %1233 = vmatpush1.msra.mxu0 %v807
    %1234 = vmatprep.subr.mxu0 0.0
    %1235 = vmatpush1.msra.mxu0 %v808
    %1236 = vmatprep.subr.mxu0 0.0
    %1237 = vmatpush1.msra.mxu0 %v809
    %1238 = vmatprep.subr.mxu0 0.0
    %1239 = vmatpush1.msra.mxu0 %v810
    %1240 = vmatprep.subr.mxu0 0.0
    %1241 = vmatpush1.msra.mxu0 %v811
    %1242 = vmatprep.subr.mxu0 0.0
    %1243 = vmatpush1.msra.mxu0 %v812
    %1244 = vmatprep.subr.mxu0 0.0
    %1245 = vmatpush1.msra.mxu0 %v813
    %1246 = vmatprep.subr.mxu0 0.0
    %1247 = vmatpush1.msra.mxu0 %v814
    %1248 = vmatprep.subr.mxu0 0.0
    %1249 = vmatpush1.msra.mxu0 %v815
    %1250 = vmatprep.subr.mxu0 0.0
    %1251 = vmatpush1.msra.mxu0 %v816
    %1252 = vmatprep.subr.mxu0 0.0
    %1253 = vmatpush1.msra.mxu0 %v817
    %1254 = vmatprep.subr.mxu0 0.0
    %1255 = vmatpush1.msra.mxu0 %v818
    %1256 = vmatprep.subr.mxu0 0.0
    %1257 = vmatpush1.msra.mxu0 %v819
    %1258 = vmatprep.subr.mxu0 0.0
    %1259 = vmatpush1.msra.mxu0 %v820
    %1260 = vmatprep.subr.mxu0 0.0
    %1261 = vmatpush1.msra.mxu0 %v821
    %1262 = vmatprep.subr.mxu0 0.0
    %1263 = vmatpush1.msra.mxu0 %v822
    %1264 = vmatprep.subr.mxu0 0.0
    %1265 = vmatpush1.msra.mxu0 %v823
    %1266 = vmatprep.mubr.f32.mxu0 %v1049
    %1267 = vmatmul.mubr.f32.gmra.mrb[0].mxu0 %v1045
    %v1268 = vpop.f32.mrb[0].mxu0
    %v1269 = vadd.f32 %v1199, %v1268
    %v1270 = vpop.f32.mrb[0].mxu0
    %1271 = vdwg.mxu0
    %1272 = vmatprep.subr.mxu0 0.0
    %1273 = vmatpush1.msra.mxu0 %v824
    %1274 = vmatprep.subr.mxu0 0.0
    %1275 = vmatpush1.msra.mxu0 %v825
    %1276 = vmatprep.subr.mxu0 0.0
    %1277 = vmatpush1.msra.mxu0 %v826
    %1278 = vmatprep.subr.mxu0 0.0
    %1279 = vmatpush1.msra.mxu0 %v827
    %1280 = vmatprep.subr.mxu0 0.0
    %1281 = vmatpush1.msra.mxu0 %v828
    %1282 = vmatprep.subr.mxu0 0.0
    %1283 = vmatpush1.msra.mxu0 %v829
    %1284 = vmatprep.subr.mxu0 0.0
    %1285 = vmatpush1.msra.mxu0 %v830
    %1286 = vmatprep.subr.mxu0 0.0
    %1287 = vmatpush1.msra.mxu0 %v831
    %1288 = vmatprep.subr.mxu0 0.0
    %1289 = vmatpush1.msra.mxu0 %v832
    %1290 = vmatprep.subr.mxu0 0.0
    %1291 = vmatpush1.msra.mxu0 %v833
    %1292 = vmatprep.subr.mxu0 0.0
    %1293 = vmatpush1.msra.mxu0 %v834
    %1294 = vmatprep.subr.mxu0 0.0
    %1295 = vmatpush1.msra.mxu0 %v835
    %1296 = vmatprep.subr.mxu0 0.0
    %1297 = vmatpush1.msra.mxu0 %v836
    %1298 = vmatprep.subr.mxu0 0.0
    %1299 = vmatpush1.msra.mxu0 %v837
    %1300 = vmatprep.subr.mxu0 0.0
    %1301 = vmatpush1.msra.mxu0 %v838
    %1302 = vmatprep.subr.mxu0 0.0
    %1303 = vmatpush1.msra.mxu0 %v839
    %1304 = vmatprep.subr.mxu0 0.0
    %1305 = vmatpush1.msra.mxu0 %v840
    %1306 = vmatprep.subr.mxu0 0.0
    %1307 = vmatpush1.msra.mxu0 %v841
    %1308 = vmatprep.subr.mxu0 0.0
    %1309 = vmatpush1.msra.mxu0 %v842
    %1310 = vmatprep.subr.mxu0 0.0
    %1311 = vmatpush1.msra.mxu0 %v843
    %1312 = vmatprep.subr.mxu0 0.0
    %1313 = vmatpush1.msra.mxu0 %v844
    %1314 = vmatprep.subr.mxu0 0.0
    %1315 = vmatpush1.msra.mxu0 %v845
    %1316 = vmatprep.subr.mxu0 0.0
    %1317 = vmatpush1.msra.mxu0 %v846
    %1318 = vmatprep.subr.mxu0 0.0
    %1319 = vmatpush1.msra.mxu0 %v847
    %1320 = vmatprep.subr.mxu0 0.0
    %1321 = vmatpush1.msra.mxu0 %v848
    %1322 = vmatprep.subr.mxu0 0.0
    %1323 = vmatpush1.msra.mxu0 %v849
    %1324 = vmatprep.subr.mxu0 0.0
    %1325 = vmatpush1.msra.mxu0 %v850
    %1326 = vmatprep.subr.mxu0 0.0
    %1327 = vmatpush1.msra.mxu0 %v851
    %1328 = vmatprep.subr.mxu0 0.0
    %1329 = vmatpush1.msra.mxu0 %v852
    %1330 = vmatprep.subr.mxu0 0.0
    %1331 = vmatpush1.msra.mxu0 %v853
    %1332 = vmatprep.subr.mxu0 0.0
    %1333 = vmatpush1.msra.mxu0 %v854
    %1334 = vmatprep.subr.mxu0 0.0
    %1335 = vmatpush1.msra.mxu0 %v855
    %1336 = vmatprep.mubr.f32.mxu0 %v1057
    %1337 = vmatmul.mubr.f32.gmra.mrb[0].mxu0 %v1053
    %v1338 = vpop.f32.mrb[0].mxu0
    %v1339 = vadd.f32 %v1269, %v1338
    %v1340 = vpop.f32.mrb[0].mxu0
    %1341 = vdwg.mxu0
    %1342 = vmatprep.subr.mxu0 0.0
    %1343 = vmatpush1.msra.mxu0 %v856
    %1344 = vmatprep.subr.mxu0 0.0
    %1345 = vmatpush1.msra.mxu0 %v857
    %1346 = vmatprep.subr.mxu0 0.0
    %1347 = vmatpush1.msra.mxu0 %v858
    %1348 = vmatprep.subr.mxu0 0.0
    %1349 = vmatpush1.msra.mxu0 %v859
    %1350 = vmatprep.subr.mxu0 0.0
    %1351 = vmatpush1.msra.mxu0 %v860
    %1352 = vmatprep.subr.mxu0 0.0
    %1353 = vmatpush1.msra.mxu0 %v861
    %1354 = vmatprep.subr.mxu0 0.0
    %1355 = vmatpush1.msra.mxu0 %v862
    %1356 = vmatprep.subr.mxu0 0.0
    %1357 = vmatpush1.msra.mxu0 %v863
    %1358 = vmatprep.subr.mxu0 0.0
    %1359 = vmatpush1.msra.mxu0 %v864
    %1360 = vmatprep.subr.mxu0 0.0
    %1361 = vmatpush1.msra.mxu0 %v865
    %1362 = vmatprep.subr.mxu0 0.0
    %1363 = vmatpush1.msra.mxu0 %v866
    %1364 = vmatprep.subr.mxu0 0.0
    %1365 = vmatpush1.msra.mxu0 %v867
    %1366 = vmatprep.subr.mxu0 0.0
    %1367 = vmatpush1.msra.mxu0 %v868
    %1368 = vmatprep.subr.mxu0 0.0
    %1369 = vmatpush1.msra.mxu0 %v869
    %1370 = vmatprep.subr.mxu0 0.0
    %1371 = vmatpush1.msra.mxu0 %v870
    %1372 = vmatprep.subr.mxu0 0.0
    %1373 = vmatpush1.msra.mxu0 %v871
    %1374 = vmatprep.subr.mxu0 0.0
    %1375 = vmatpush1.msra.mxu0 0.0
    %1376 = vmatprep.subr.mxu0 0.0
    %1377 = vmatpush1.msra.mxu0 0.0
    %1378 = vmatprep.subr.mxu0 0.0
    %1379 = vmatpush1.msra.mxu0 0.0
    %1380 = vmatprep.subr.mxu0 0.0
    %1381 = vmatpush1.msra.mxu0 0.0
    %1382 = vmatprep.subr.mxu0 0.0
    %1383 = vmatpush1.msra.mxu0 0.0
    %1384 = vmatprep.subr.mxu0 0.0
    %1385 = vmatpush1.msra.mxu0 0.0
    %1386 = vmatprep.subr.mxu0 0.0
    %1387 = vmatpush1.msra.mxu0 0.0
    %1388 = vmatprep.subr.mxu0 0.0
    %1389 = vmatpush1.msra.mxu0 0.0
    %1390 = vmatprep.subr.mxu0 0.0
    %1391 = vmatpush1.msra.mxu0 0.0
    %1392 = vmatprep.subr.mxu0 0.0
    %1393 = vmatpush1.msra.mxu0 0.0
    %1394 = vmatprep.subr.mxu0 0.0
    %1395 = vmatpush1.msra.mxu0 0.0
    %1396 = vmatprep.subr.mxu0 0.0
    %1397 = vmatpush1.msra.mxu0 0.0
    %1398 = vmatprep.subr.mxu0 0.0
    %1399 = vmatpush1.msra.mxu0 0.0
    %1400 = vmatprep.subr.mxu0 0.0
    %1401 = vmatpush1.msra.mxu0 0.0
    %1402 = vmatprep.subr.mxu0 0.0
    %1403 = vmatpush1.msra.mxu0 0.0
    %1404 = vmatprep.subr.mxu0 0.0
    %1405 = vmatpush1.msra.mxu0 0.0
    %1406 = vmatprep.mubr.f32.mxu0 0.0
    %1407 = vmatmul.mubr.f32.gmra.mrb[0].mxu0 %v1061
    %v1408 = vpop.f32.mrb[0].mxu0
    %v1409 = vadd.f32 %v1339, %v1408
    %v1410 = vpop.f32.mrb[0].mxu0
    %1411 = vdwg.mxu0
    %1412 = vst [vmem:[#allocation7] sm:$0xff] %v1409
    // Predicated region
    $region22: #{kan_forward.1} parent=1 // pred_check
      _
    $region23: #{kan_forward.1} parent=1 // pred_check_branch
      %1414 = sbr.rel (0) target = $region25
    $region24: #{kan_forward.1} parent=1 // pred_region
      %s1416 = ssub.s32 128, 128
      %1417 = vsyncadd [#allocation4], %s1416
      %s1419 = sshll.u32 [#allocation7], 4
      %s1420 = int_to_ptr.vmem [resolvable:$true] %s1419
      %1422 = dma.vmem_to_hbm [thread:$0]  %s1420, 128, %s3, [#allocation4]
    $region25: #{kan_forward.1} parent=1 // pred_fallthru
      _
    // Predicated region
    $region26: #{kan_forward.1} parent=1 // pred_check
      _
    $region27: #{kan_forward.1} parent=1 // pred_check_branch
      %1424 = sbr.rel (0) target = $region29
    $region28: #{kan_forward.1} parent=1 // pred_region
      %1425 = dma.done [#allocation4], 128
    $region29: #{kan_forward.1} parent=1 // pred_fallthru
      _
    %1426 = vsyncpa [#allocation3], 1
    %1427 = vsyncpa [#allocation6], 1
    %1428 = vsyncpa [#allocation4], 1

</llo_original>
